<compile_context>
chip_gen: v7x
topology: tpu7x:2x2x1
jax: 0.10.0
libtpu: 0.0.40
codegen_flags: <defaults>
</compile_context>

<pallas_src>
import jax
import jax.numpy as jnp
from jax.experimental import pallas as pl
from jax.experimental.pallas import tpu as pltpu

MAX_LOG_SIGMA = 2.0
MIN_LOG_SIGMA = -20.0

OBS_DIM = 8       # LunarLander-style observation
GOAL_DIM = 8
OUT_DIM = 2       # continuous action dim
H_EMB = 200
H_CAT = 400
H_MID = 100

BATCH = 256       # many env steps batched per call (amortizes weight DMA + launch)
TB = 128          # batch tile: multiple of 8 sublanes, decent MXU M-dim


def _policy_kernel(obs_ref, goal_ref,
                   w_obs_ref, b_obs_ref,
                   w_goal_ref, b_goal_ref,
                   w1_obs_ref, w1_goal_ref, b1_ref,
                   w_heads_ref, b_heads_ref,
                   out_ref):
    # obs / goal embeddings: Linear + ReLU. Weights are bf16; MXU accumulates
    # in f32 (preferred_element_type); elementwise math stays f32.
    obs = obs_ref[...].astype(jnp.bfloat16)
    goal = goal_ref[...].astype(jnp.bfloat16)

    h_obs = jnp.dot(obs, w_obs_ref[...], preferred_element_type=jnp.float32)
    h_obs = jnp.maximum(h_obs + b_obs_ref[...], 0.0)            # (TB, 200)
    h_goal = jnp.dot(goal, w_goal_ref[...], preferred_element_type=jnp.float32)
    h_goal = jnp.maximum(h_goal + b_goal_ref[...], 0.0)         # (TB, 200)

    # layer1 without the lane-axis concat: W1 pre-split into obs/goal row halves.
    h1 = jnp.dot(h_obs.astype(jnp.bfloat16), w1_obs_ref[...],
                 preferred_element_type=jnp.float32)
    h1 = h1 + jnp.dot(h_goal.astype(jnp.bfloat16), w1_goal_ref[...],
                      preferred_element_type=jnp.float32)
    h1 = jnp.maximum(h1 + b1_ref[...], 0.0)                     # (TB, 100)

    # Fused heads: one matmul, one store of (TB, 2*OUT_DIM).
    head = jnp.dot(h1.astype(jnp.bfloat16), w_heads_ref[...],
                   preferred_element_type=jnp.float32) + b_heads_ref[...]

    # log_sigma = clamp(relu(x), MIN, MAX) == clip(x, 0, MAX) since MIN < 0.
    ls = jnp.clip(head, 0.0, MAX_LOG_SIGMA)
    col = jax.lax.broadcasted_iota(jnp.int32, head.shape, 1)
    out_ref[...] = jnp.where(col >= OUT_DIM, ls, head).astype(out_ref.dtype)


def pack_params(params):
    """One-time wrapper-side packing: bf16 weights, fused heads, split W1."""
    return {
        "w_obs": params["w_obs"].astype(jnp.bfloat16),
        "b_obs": params["b_obs"].astype(jnp.float32),
        "w_goal": params["w_goal"].astype(jnp.bfloat16),
        "b_goal": params["b_goal"].astype(jnp.float32),
        "w1_obs": params["w1"][:H_EMB, :].astype(jnp.bfloat16),
        "w1_goal": params["w1"][H_EMB:, :].astype(jnp.bfloat16),
        "b1": params["b1"].astype(jnp.float32),
        "w_heads": jnp.concatenate([params["w2"], params["w3"]],
                                   axis=1).astype(jnp.bfloat16),
        "b_heads": jnp.concatenate([params["b2"], params["b3"]],
                                   axis=1).astype(jnp.float32),
    }


def policy_network_sac_forward(obs, goal, packed, *, tb=TB):
    """Returns (mu, log_sigma), both (B, OUT_DIM) float32."""
    B = obs.shape[0]
    n_tiles = pl.cdiv(B, tb)
    bp = n_tiles * tb
    if bp != B:
        obs = jnp.pad(obs, ((0, bp - B), (0, 0)))
        goal = jnp.pad(goal, ((0, bp - B), (0, 0)))

    def act_spec(cols):
        return pl.BlockSpec((tb, cols), lambda i: (i, 0))

    def const_spec(arr):
        # Whole-array block, constant index -> DMA'd once, VMEM-resident.
        return pl.BlockSpec(arr.shape, lambda i: (0, 0))

    weights = (packed["w_obs"], packed["b_obs"],
               packed["w_goal"], packed["b_goal"],
               packed["w1_obs"], packed["w1_goal"], packed["b1"],
               packed["w_heads"], packed["b_heads"])

    out = pl.pallas_call(
        _policy_kernel,
        out_shape=jax.ShapeDtypeStruct((bp, 2 * OUT_DIM), jnp.float32),
        grid_spec=pltpu.PrefetchScalarGridSpec(
            num_scalar_prefetch=0,
            grid=(n_tiles,),
            in_specs=[act_spec(OBS_DIM), act_spec(GOAL_DIM)]
                     + [const_spec(w) for w in weights],
            out_specs=pl.BlockSpec((tb, 2 * OUT_DIM), lambda i: (i, 0)),
        ),
        compiler_params=pltpu.CompilerParams(
            dimension_semantics=("parallel",)),
    )(obs, goal, *weights)

    mu = out[:B, :OUT_DIM]
    log_sigma = out[:B, OUT_DIM:]
    return mu, log_sigma


def init_params(key):
    """PyTorch-default-style init: U(-1/sqrt(fan_in), 1/sqrt(fan_in))."""
    def linear(key, fan_in, fan_out):
        kw, kb = jax.random.split(key)
        bound = 1.0 / jnp.sqrt(fan_in)
        w = jax.random.uniform(kw, (fan_in, fan_out), jnp.float32, -bound, bound)
        b = jax.random.uniform(kb, (1, fan_out), jnp.float32, -bound, bound)
        return w, b

    keys = jax.random.split(key, 5)
    p = {}
    p["w_obs"], p["b_obs"] = linear(keys[0], OBS_DIM, H_EMB)
    p["w_goal"], p["b_goal"] = linear(keys[1], GOAL_DIM, H_EMB)
    p["w1"], p["b1"] = linear(keys[2], H_CAT, H_MID)
    p["w2"], p["b2"] = linear(keys[3], H_MID, OUT_DIM)
    p["w3"], p["b3"] = linear(keys[4], H_MID, OUT_DIM)
    return p


def reference_forward(obs, goal, packed):
    """f32 reference using the same bf16-rounded weights; emulates the kernel's
    bf16 activation casts so the comparison is tight."""
    def bf(x):
        return x.astype(jnp.bfloat16).astype(jnp.float32)

    w_obs = packed["w_obs"].astype(jnp.float32)
    w_goal = packed["w_goal"].astype(jnp.float32)
    w1_obs = packed["w1_obs"].astype(jnp.float32)
    w1_goal = packed["w1_goal"].astype(jnp.float32)
    w_heads = packed["w_heads"].astype(jnp.float32)

    h_obs = jnp.maximum(bf(obs) @ w_obs + packed["b_obs"], 0.0)
    h_goal = jnp.maximum(bf(goal) @ w_goal + packed["b_goal"], 0.0)
    h1 = jnp.maximum(bf(h_obs) @ w1_obs + bf(h_goal) @ w1_goal + packed["b1"], 0.0)
    head = bf(h1) @ w_heads + packed["b_heads"]
    mu = head[:, :OUT_DIM]
    ls = jnp.clip(jnp.maximum(head[:, OUT_DIM:], 0.0),
                  MIN_LOG_SIGMA, MAX_LOG_SIGMA)
    return mu, ls


if __name__ == "__main__":
    key = jax.random.PRNGKey(0)
    k_obs, k_goal, k_params = jax.random.split(key, 3)

    obs = jax.random.normal(k_obs, (BATCH, OBS_DIM), jnp.float32)
    goal = jax.random.normal(k_goal, (BATCH, GOAL_DIM), jnp.float32)
    params = init_params(k_params)
    packed = pack_params(params)

    mu, log_sigma = policy_network_sac_forward(obs, goal, packed)
    mu, log_sigma = jax.block_until_ready((mu, log_sigma))

    mu_ref, ls_ref = reference_forward(obs, goal, packed)
    assert mu.shape == (BATCH, OUT_DIM) and log_sigma.shape == (BATCH, OUT_DIM)
    assert jnp.allclose(mu, mu_ref, atol=2e-2, rtol=2e-2)
    assert jnp.allclose(log_sigma, ls_ref, atol=2e-2, rtol=2e-2)

    print("KERNEL_OK")
</pallas_src>

<mosaic_0001>
module attributes {stable_mosaic.version = 11 : i64} {
  func.func @_policy_kernel(%arg0: i32, %arg1: memref<128x8xf32, #tpu.memory_space<vmem>>, %arg2: memref<128x8xf32, #tpu.memory_space<vmem>>, %arg3: memref<8x200xbf16, #tpu.memory_space<vmem>>, %arg4: memref<1x200xf32, #tpu.memory_space<vmem>>, %arg5: memref<8x200xbf16, #tpu.memory_space<vmem>>, %arg6: memref<1x200xf32, #tpu.memory_space<vmem>>, %arg7: memref<200x100xbf16, #tpu.memory_space<vmem>>, %arg8: memref<200x100xbf16, #tpu.memory_space<vmem>>, %arg9: memref<1x100xf32, #tpu.memory_space<vmem>>, %arg10: memref<100x4xbf16, #tpu.memory_space<vmem>>, %arg11: memref<1x4xf32, #tpu.memory_space<vmem>>, %arg12: memref<128x4xf32, #tpu.memory_space<vmem>>) attributes {dimension_semantics = [#tpu.dimension_semantics<parallel>], iteration_bounds = array<i64: 2>, scalar_prefetch = 0 : i64, scratch_operands = 0 : i64, tpu.core_type = #tpu.core_type<tc>, window_params = [{transform_indices = @transform_0, window_bounds = array<i64: 128, 8>}, {transform_indices = @transform_1, window_bounds = array<i64: 128, 8>}, {pipeline_mode = #tpu.pipeline_mode<synchronous>, transform_indices = @transform_2, window_bounds = array<i64: 8, 200>}, {pipeline_mode = #tpu.pipeline_mode<synchronous>, transform_indices = @transform_3, window_bounds = array<i64: 1, 200>}, {pipeline_mode = #tpu.pipeline_mode<synchronous>, transform_indices = @transform_4, window_bounds = array<i64: 8, 200>}, {pipeline_mode = #tpu.pipeline_mode<synchronous>, transform_indices = @transform_5, window_bounds = array<i64: 1, 200>}, {pipeline_mode = #tpu.pipeline_mode<synchronous>, transform_indices = @transform_6, window_bounds = array<i64: 200, 100>}, {pipeline_mode = #tpu.pipeline_mode<synchronous>, transform_indices = @transform_7, window_bounds = array<i64: 200, 100>}, {pipeline_mode = #tpu.pipeline_mode<synchronous>, transform_indices = @transform_8, window_bounds = array<i64: 1, 100>}, {pipeline_mode = #tpu.pipeline_mode<synchronous>, transform_indices = @transform_9, window_bounds = array<i64: 100, 4>}, {pipeline_mode = #tpu.pipeline_mode<synchronous>, transform_indices = @transform_10, window_bounds = array<i64: 1, 4>}, {transform_indices = @transform_11, window_bounds = array<i64: 128, 4>}]} {
    %c0 = arith.constant 0 : index
    %c0_0 = arith.constant 0 : index
    %0 = vector.load %arg1[%c0, %c0_0] : memref<128x8xf32, #tpu.memory_space<vmem>>, vector<128x8xf32>
    %1 = arith.truncf %0 : vector<128x8xf32> to vector<128x8xbf16>
    %c0_1 = arith.constant 0 : index
    %c0_2 = arith.constant 0 : index
    %2 = vector.load %arg2[%c0_1, %c0_2] : memref<128x8xf32, #tpu.memory_space<vmem>>, vector<128x8xf32>
    %3 = arith.truncf %2 : vector<128x8xf32> to vector<128x8xbf16>
    %c0_3 = arith.constant 0 : index
    %c0_4 = arith.constant 0 : index
    %4 = vector.load %arg3[%c0_3, %c0_4] : memref<8x200xbf16, #tpu.memory_space<vmem>>, vector<8x200xbf16>
    %cst = arith.constant dense<0.000000e+00> : vector<128x200xf32>
    %5 = tpu.matmul %1, %4, %cst {dimension_numbers = #tpu.dot_dimension_numbers<[1], [0], [0], [1], [0, 0, 1, 1], [], []>} : vector<128x8xbf16>, vector<8x200xbf16>, vector<128x200xf32> -> vector<128x200xf32>
    %c0_5 = arith.constant 0 : index
    %c0_6 = arith.constant 0 : index
    %6 = vector.load %arg4[%c0_5, %c0_6] : memref<1x200xf32, #tpu.memory_space<vmem>>, vector<1x200xf32>
    %7 = vector.broadcast %6 : vector<1x200xf32> to vector<128x200xf32>
    %8 = arith.addf %5, %7 : vector<128x200xf32>
    %cst_7 = arith.constant 0.000000e+00 : f32
    %9 = vector.broadcast %cst_7 : f32 to vector<128x200xf32>
    %10 = arith.maximumf %8, %9 : vector<128x200xf32>
    %c0_8 = arith.constant 0 : index
    %c0_9 = arith.constant 0 : index
    %11 = vector.load %arg5[%c0_8, %c0_9] : memref<8x200xbf16, #tpu.memory_space<vmem>>, vector<8x200xbf16>
    %cst_10 = arith.constant dense<0.000000e+00> : vector<128x200xf32>
    %12 = tpu.matmul %3, %11, %cst_10 {dimension_numbers = #tpu.dot_dimension_numbers<[1], [0], [0], [1], [0, 0, 1, 1], [], []>} : vector<128x8xbf16>, vector<8x200xbf16>, vector<128x200xf32> -> vector<128x200xf32>
    %c0_11 = arith.constant 0 : index
    %c0_12 = arith.constant 0 : index
    %13 = vector.load %arg6[%c0_11, %c0_12] : memref<1x200xf32, #tpu.memory_space<vmem>>, vector<1x200xf32>
    %14 = vector.broadcast %13 : vector<1x200xf32> to vector<128x200xf32>
    %15 = arith.addf %12, %14 : vector<128x200xf32>
    %cst_13 = arith.constant 0.000000e+00 : f32
    %16 = vector.broadcast %cst_13 : f32 to vector<128x200xf32>
    %17 = arith.maximumf %15, %16 : vector<128x200xf32>
    %18 = arith.truncf %10 : vector<128x200xf32> to vector<128x200xbf16>
    %c0_14 = arith.constant 0 : index
    %c0_15 = arith.constant 0 : index
    %19 = vector.load %arg7[%c0_14, %c0_15] : memref<200x100xbf16, #tpu.memory_space<vmem>>, vector<200x100xbf16>
    %cst_16 = arith.constant dense<0.000000e+00> : vector<128x100xf32>
    %20 = tpu.matmul %18, %19, %cst_16 {dimension_numbers = #tpu.dot_dimension_numbers<[1], [0], [0], [1], [0, 0, 1, 1], [], []>} : vector<128x200xbf16>, vector<200x100xbf16>, vector<128x100xf32> -> vector<128x100xf32>
    %21 = arith.truncf %17 : vector<128x200xf32> to vector<128x200xbf16>
    %c0_17 = arith.constant 0 : index
    %c0_18 = arith.constant 0 : index
    %22 = vector.load %arg8[%c0_17, %c0_18] : memref<200x100xbf16, #tpu.memory_space<vmem>>, vector<200x100xbf16>
    %cst_19 = arith.constant dense<0.000000e+00> : vector<128x100xf32>
    %23 = tpu.matmul %21, %22, %cst_19 {dimension_numbers = #tpu.dot_dimension_numbers<[1], [0], [0], [1], [0, 0, 1, 1], [], []>} : vector<128x200xbf16>, vector<200x100xbf16>, vector<128x100xf32> -> vector<128x100xf32>
    %24 = arith.addf %20, %23 : vector<128x100xf32>
    %c0_20 = arith.constant 0 : index
    %c0_21 = arith.constant 0 : index
    %25 = vector.load %arg9[%c0_20, %c0_21] : memref<1x100xf32, #tpu.memory_space<vmem>>, vector<1x100xf32>
    %26 = vector.broadcast %25 : vector<1x100xf32> to vector<128x100xf32>
    %27 = arith.addf %24, %26 : vector<128x100xf32>
    %cst_22 = arith.constant 0.000000e+00 : f32
    %28 = vector.broadcast %cst_22 : f32 to vector<128x100xf32>
    %29 = arith.maximumf %27, %28 : vector<128x100xf32>
    %30 = arith.truncf %29 : vector<128x100xf32> to vector<128x100xbf16>
    %c0_23 = arith.constant 0 : index
    %c0_24 = arith.constant 0 : index
    %31 = vector.load %arg10[%c0_23, %c0_24] : memref<100x4xbf16, #tpu.memory_space<vmem>>, vector<100x4xbf16>
    %cst_25 = arith.constant dense<0.000000e+00> : vector<128x4xf32>
    %32 = tpu.matmul %30, %31, %cst_25 {dimension_numbers = #tpu.dot_dimension_numbers<[1], [0], [0], [1], [0, 0, 1, 1], [], []>} : vector<128x100xbf16>, vector<100x4xbf16>, vector<128x4xf32> -> vector<128x4xf32>
    %c0_26 = arith.constant 0 : index
    %c0_27 = arith.constant 0 : index
    %33 = vector.load %arg11[%c0_26, %c0_27] : memref<1x4xf32, #tpu.memory_space<vmem>>, vector<1x4xf32>
    %34 = vector.broadcast %33 : vector<1x4xf32> to vector<128x4xf32>
    %35 = arith.addf %32, %34 : vector<128x4xf32>
    %cst_28 = arith.constant 0.000000e+00 : f32
    %cst_29 = arith.constant 2.000000e+00 : f32
    %36 = vector.broadcast %cst_28 : f32 to vector<128x4xf32>
    %37 = arith.maximumf %36, %35 : vector<128x4xf32>
    %38 = vector.broadcast %cst_29 : f32 to vector<128x4xf32>
    %39 = arith.minimumf %38, %37 : vector<128x4xf32>
    %40 = tpu.iota {dimensions = array<i32: 1>} : vector<128x4xi32>
    %c2_i32 = arith.constant 2 : i32
    %41 = vector.broadcast %c2_i32 : i32 to vector<128x4xi32>
    %42 = arith.cmpi sge, %40, %41 : vector<128x4xi32>
    %43 = arith.select %42, %39, %35 : vector<128x4xi1>, vector<128x4xf32>
    %c0_30 = arith.constant 0 : index
    %c0_31 = arith.constant 0 : index
    %44 = vector.load %arg12[%c0_30, %c0_31] : memref<128x4xf32, #tpu.memory_space<vmem>>, vector<128x4xf32>
    tpu.vector_store %arg12[%c0_30, %c0_31], %43 {strides = array<i32>} : memref<128x4xf32, #tpu.memory_space<vmem>>, vector<128x4xf32>,
    return
  }
  func.func @transform_0(%arg0: i32) -> (i32, i32) {
    %c0_i32 = arith.constant 0 : i32
    %c0_i32_0 = arith.constant 0 : i32
    return %arg0, %c0_i32 : i32, i32
  }
  func.func @transform_1(%arg0: i32) -> (i32, i32) {
    %c0_i32 = arith.constant 0 : i32
    %c0_i32_0 = arith.constant 0 : i32
    return %arg0, %c0_i32 : i32, i32
  }
  func.func @transform_2(%arg0: i32) -> (i32, i32) {
    %c0_i32 = arith.constant 0 : i32
    %c0_i32_0 = arith.constant 0 : i32
    %c0_i32_1 = arith.constant 0 : i32
    return %c0_i32, %c0_i32_0 : i32, i32
  }
  func.func @transform_3(%arg0: i32) -> (i32, i32) {
    %c0_i32 = arith.constant 0 : i32
    %c0_i32_0 = arith.constant 0 : i32
    %c0_i32_1 = arith.constant 0 : i32
    return %c0_i32, %c0_i32_0 : i32, i32
  }
  func.func @transform_4(%arg0: i32) -> (i32, i32) {
    %c0_i32 = arith.constant 0 : i32
    %c0_i32_0 = arith.constant 0 : i32
    %c0_i32_1 = arith.constant 0 : i32
    return %c0_i32, %c0_i32_0 : i32, i32
  }
  func.func @transform_5(%arg0: i32) -> (i32, i32) {
    %c0_i32 = arith.constant 0 : i32
    %c0_i32_0 = arith.constant 0 : i32
    %c0_i32_1 = arith.constant 0 : i32
    return %c0_i32, %c0_i32_0 : i32, i32
  }
  func.func @transform_6(%arg0: i32) -> (i32, i32) {
    %c0_i32 = arith.constant 0 : i32
    %c0_i32_0 = arith.constant 0 : i32
    %c0_i32_1 = arith.constant 0 : i32
    return %c0_i32, %c0_i32_0 : i32, i32
  }
  func.func @transform_7(%arg0: i32) -> (i32, i32) {
    %c0_i32 = arith.constant 0 : i32
    %c0_i32_0 = arith.constant 0 : i32
    %c0_i32_1 = arith.constant 0 : i32
    return %c0_i32, %c0_i32_0 : i32, i32
  }
  func.func @transform_8(%arg0: i32) -> (i32, i32) {
    %c0_i32 = arith.constant 0 : i32
    %c0_i32_0 = arith.constant 0 : i32
    %c0_i32_1 = arith.constant 0 : i32
    return %c0_i32, %c0_i32_0 : i32, i32
  }
  func.func @transform_9(%arg0: i32) -> (i32, i32) {
    %c0_i32 = arith.constant 0 : i32
    %c0_i32_0 = arith.constant 0 : i32
    %c0_i32_1 = arith.constant 0 : i32
    return %c0_i32, %c0_i32_0 : i32, i32
  }
  func.func @transform_10(%arg0: i32) -> (i32, i32) {
    %c0_i32 = arith.constant 0 : i32
    %c0_i32_0 = arith.constant 0 : i32
    %c0_i32_1 = arith.constant 0 : i32
    return %c0_i32, %c0_i32_0 : i32, i32
  }
  func.func @transform_11(%arg0: i32) -> (i32, i32) {
    %c0_i32 = arith.constant 0 : i32
    %c0_i32_0 = arith.constant 0 : i32
    return %arg0, %c0_i32 : i32, i32
  }
}

</mosaic_0001>

<llo_original>
// kernel: tpu_custom_call.1
$region0: #{tpu_custom_call.1}
  #allocation0 [shape = 'u32[]', space=smem, size = 0x4, offset = 0x4, fixed_abs, tag = 'smem constant byte address 0x4 - core index']
  #allocation1 [shape = 'u32[144,128]{1,0:T(1,128)}', space=vmem, size = 0x12000, scoped, tag = 'internal scratch']
  %s0 = inlined_call_operand.vmem [shape: f32[256,8], index: 0, kind: input, shape index: {}]
  %s1 = inlined_call_operand.vmem [shape: f32[256,8], index: 1, kind: input, shape index: {}]
  %s2 = inlined_call_operand.vmem [shape: bf16[8,200], index: 2, kind: input, shape index: {}]
  %s3 = inlined_call_operand.vmem [shape: f32[1,200], index: 3, kind: input, shape index: {}]
  %s4 = inlined_call_operand.vmem [shape: bf16[8,200], index: 4, kind: input, shape index: {}]
  %s5 = inlined_call_operand.vmem [shape: f32[1,200], index: 5, kind: input, shape index: {}]
  %s6 = inlined_call_operand.vmem [shape: bf16[200,100], index: 6, kind: input, shape index: {}]
  %s7 = inlined_call_operand.vmem [shape: bf16[200,100], index: 7, kind: input, shape index: {}]
  %s8 = inlined_call_operand.vmem [shape: f32[1,100], index: 8, kind: input, shape index: {}]
  %s9 = inlined_call_operand.vmem [shape: bf16[100,4], index: 9, kind: input, shape index: {}]
  %s10 = inlined_call_operand.vmem [shape: f32[1,4], index: 10, kind: input, shape index: {}]
  %s11 = inlined_call_operand.vmem [shape: f32[256,4], index: 11, kind: output, shape index: {}]
  %s12 = sld [smem:[#allocation0]]
  $region77: #{tpu_custom_call.1} parent=0
    _
  %s14 = ssub.s32 1, %s12
  %s15 = scalar_select 0, %s14, %s12
  loop: start=0, step=1, limit=4
  $region2: #{tpu_custom_call.1} parent=0 // loop_pre_header
    _
  $region3: #{tpu_custom_call.1} parent=0 // loop_header
    %s17 = sphi 0, %s21
    %p18 = scmp.ge.s32.totalorder %s17, 4
    %s27 = sphi 0, %s29
    %s30 = sphi 0, %s27
    %s31 = sphi 0, %s30
    %s47 = sphi 0, %s31
    %s53 = sphi 0, %s55
    %s56 = sphi 0, %s53
    %s57 = sphi 0, %s56
    %s73 = sphi 0, %s57
    %s77 = sphi 0, %s77
    %s79 = sphi 0, %s77
    %s80 = sphi 0, %s79
    %s94 = sphi 0, %s80
    %s98 = sphi 0, %s98
    %s100 = sphi 0, %s98
    %s101 = sphi 0, %s100
    %s115 = sphi 0, %s101
    %s119 = sphi 0, %s119
    %s121 = sphi 0, %s119
    %s122 = sphi 0, %s121
    %s136 = sphi 0, %s122
    %s140 = sphi 0, %s140
    %s142 = sphi 0, %s140
    %s143 = sphi 0, %s142
    %s157 = sphi 0, %s143
    %s161 = sphi 0, %s161
    %s163 = sphi 0, %s161
    %s164 = sphi 0, %s163
    %s178 = sphi 0, %s164
    %s182 = sphi 0, %s182
    %s184 = sphi 0, %s182
    %s185 = sphi 0, %s184
    %s199 = sphi 0, %s185
    %s203 = sphi 0, %s203
    %s205 = sphi 0, %s203
    %s206 = sphi 0, %s205
    %s220 = sphi 0, %s206
    %s224 = sphi 0, %s224
    %s226 = sphi 0, %s224
    %s227 = sphi 0, %s226
    %s241 = sphi 0, %s227
    %s245 = sphi 0, %s245
    %s247 = sphi 0, %s245
    %s248 = sphi 0, %s247
    %s262 = sphi 0, %s248
    %s268 = sphi 0, %s270
    %s271 = sphi 0, %s268
    %s272 = sphi 0, %s271
    %s288 = sphi 0, %s272
  $region4: #{tpu_custom_call.1} parent=0 // loop_header_branch
    %20 = sbr.rel (%p18) target = $region8
  $region5: #{tpu_custom_call.1} parent=0 // loop_body
    %s22 = ssub.s32 %s17, 1
    %s23 = ssub.s32 %s17, 2
    %s24 = sadd.s32 %s17, 1
    %s25 = ssub.s32 %s17, %s24
    %p26 = scmp.eq.s32.totalorder %s25, 0
    %s28 = sadd.s32 %s27, 1
    %s29 = scalar_select %p26, %s27, %s28
    %p32 = pneg %p26
    %p33 = scmp.eq.s32.totalorder %s17, 1
    %p34 = por %p32, %p33
    %p35 = scmp.ne.s32.totalorder %s27, %s30
    %p36 = scmp.eq.s32.totalorder %s17, 0
    %p37 = por %p35, %p36
    %p38 = scmp.ne.s32.totalorder %s27, %s30
    %p39 = scmp.eq.s32.totalorder %s22, 1
    %p40 = por %p38, %p39
    %p41 = scmp.ne.s32.totalorder %s30, %s31
    %p42 = scmp.eq.s32.totalorder %s22, 0
    %p43 = por %p41, %p42
    %p44 = scmp.ne.s32.totalorder %s30, %s31
    %p45 = scmp.eq.s32.totalorder %s23, 1
    %p46 = por %p44, %p45
    %p48 = scmp.ne.s32.totalorder %s31, %s47
    %p49 = scmp.eq.s32.totalorder %s23, 0
    %p50 = por %p48, %p49
    %s51 = ssub.s32 %s17, %s24
    %p52 = scmp.eq.s32.totalorder %s51, 0
    %s54 = sadd.s32 %s53, 1
    %s55 = scalar_select %p52, %s53, %s54
    %p58 = pneg %p52
    %p59 = scmp.eq.s32.totalorder %s17, 1
    %p60 = por %p58, %p59
    %p61 = scmp.ne.s32.totalorder %s53, %s56
    %p62 = scmp.eq.s32.totalorder %s17, 0
    %p63 = por %p61, %p62
    %p64 = scmp.ne.s32.totalorder %s53, %s56
    %p65 = scmp.eq.s32.totalorder %s22, 1
    %p66 = por %p64, %p65
    %p67 = scmp.ne.s32.totalorder %s56, %s57
    %p68 = scmp.eq.s32.totalorder %s22, 0
    %p69 = por %p67, %p68
    %p70 = scmp.ne.s32.totalorder %s56, %s57
    %p71 = scmp.eq.s32.totalorder %s23, 1
    %p72 = por %p70, %p71
    %p74 = scmp.ne.s32.totalorder %s57, %s73
    %p75 = scmp.eq.s32.totalorder %s23, 0
    %p76 = por %p74, %p75
    %s78 = sadd.s32 %s77, 1
    %p81 = scmp.eq.s32.totalorder %s17, 1
    %p82 = scmp.ne.s32.totalorder %s77, %s79
    %p83 = scmp.eq.s32.totalorder %s17, 0
    %p84 = por %p82, %p83
    %p85 = scmp.ne.s32.totalorder %s77, %s79
    %p86 = scmp.eq.s32.totalorder %s22, 1
    %p87 = por %p85, %p86
    %p88 = scmp.ne.s32.totalorder %s79, %s80
    %p89 = scmp.eq.s32.totalorder %s22, 0
    %p90 = por %p88, %p89
    %p91 = scmp.ne.s32.totalorder %s79, %s80
    %p92 = scmp.eq.s32.totalorder %s23, 1
    %p93 = por %p91, %p92
    %p95 = scmp.ne.s32.totalorder %s80, %s94
    %p96 = scmp.eq.s32.totalorder %s23, 0
    %p97 = por %p95, %p96
    %s99 = sadd.s32 %s98, 1
    %p102 = scmp.eq.s32.totalorder %s17, 1
    %p103 = scmp.ne.s32.totalorder %s98, %s100
    %p104 = scmp.eq.s32.totalorder %s17, 0
    %p105 = por %p103, %p104
    %p106 = scmp.ne.s32.totalorder %s98, %s100
    %p107 = scmp.eq.s32.totalorder %s22, 1
    %p108 = por %p106, %p107
    %p109 = scmp.ne.s32.totalorder %s100, %s101
    %p110 = scmp.eq.s32.totalorder %s22, 0
    %p111 = por %p109, %p110
    %p112 = scmp.ne.s32.totalorder %s100, %s101
    %p113 = scmp.eq.s32.totalorder %s23, 1
    %p114 = por %p112, %p113
    %p116 = scmp.ne.s32.totalorder %s101, %s115
    %p117 = scmp.eq.s32.totalorder %s23, 0
    %p118 = por %p116, %p117
    %s120 = sadd.s32 %s119, 1
    %p123 = scmp.eq.s32.totalorder %s17, 1
    %p124 = scmp.ne.s32.totalorder %s119, %s121
    %p125 = scmp.eq.s32.totalorder %s17, 0
    %p126 = por %p124, %p125
    %p127 = scmp.ne.s32.totalorder %s119, %s121
    %p128 = scmp.eq.s32.totalorder %s22, 1
    %p129 = por %p127, %p128
    %p130 = scmp.ne.s32.totalorder %s121, %s122
    %p131 = scmp.eq.s32.totalorder %s22, 0
    %p132 = por %p130, %p131
    %p133 = scmp.ne.s32.totalorder %s121, %s122
    %p134 = scmp.eq.s32.totalorder %s23, 1
    %p135 = por %p133, %p134
    %p137 = scmp.ne.s32.totalorder %s122, %s136
    %p138 = scmp.eq.s32.totalorder %s23, 0
    %p139 = por %p137, %p138
    %s141 = sadd.s32 %s140, 1
    %p144 = scmp.eq.s32.totalorder %s17, 1
    %p145 = scmp.ne.s32.totalorder %s140, %s142
    %p146 = scmp.eq.s32.totalorder %s17, 0
    %p147 = por %p145, %p146
    %p148 = scmp.ne.s32.totalorder %s140, %s142
    %p149 = scmp.eq.s32.totalorder %s22, 1
    %p150 = por %p148, %p149
    %p151 = scmp.ne.s32.totalorder %s142, %s143
    %p152 = scmp.eq.s32.totalorder %s22, 0
    %p153 = por %p151, %p152
    %p154 = scmp.ne.s32.totalorder %s142, %s143
    %p155 = scmp.eq.s32.totalorder %s23, 1
    %p156 = por %p154, %p155
    %p158 = scmp.ne.s32.totalorder %s143, %s157
    %p159 = scmp.eq.s32.totalorder %s23, 0
    %p160 = por %p158, %p159
    %s162 = sadd.s32 %s161, 1
    %p165 = scmp.eq.s32.totalorder %s17, 1
    %p166 = scmp.ne.s32.totalorder %s161, %s163
    %p167 = scmp.eq.s32.totalorder %s17, 0
    %p168 = por %p166, %p167
    %p169 = scmp.ne.s32.totalorder %s161, %s163
    %p170 = scmp.eq.s32.totalorder %s22, 1
    %p171 = por %p169, %p170
    %p172 = scmp.ne.s32.totalorder %s163, %s164
    %p173 = scmp.eq.s32.totalorder %s22, 0
    %p174 = por %p172, %p173
    %p175 = scmp.ne.s32.totalorder %s163, %s164
    %p176 = scmp.eq.s32.totalorder %s23, 1
    %p177 = por %p175, %p176
    %p179 = scmp.ne.s32.totalorder %s164, %s178
    %p180 = scmp.eq.s32.totalorder %s23, 0
    %p181 = por %p179, %p180
    %s183 = sadd.s32 %s182, 1
    %p186 = scmp.eq.s32.totalorder %s17, 1
    %p187 = scmp.ne.s32.totalorder %s182, %s184
    %p188 = scmp.eq.s32.totalorder %s17, 0
    %p189 = por %p187, %p188
    %p190 = scmp.ne.s32.totalorder %s182, %s184
    %p191 = scmp.eq.s32.totalorder %s22, 1
    %p192 = por %p190, %p191
    %p193 = scmp.ne.s32.totalorder %s184, %s185
    %p194 = scmp.eq.s32.totalorder %s22, 0
    %p195 = por %p193, %p194
    %p196 = scmp.ne.s32.totalorder %s184, %s185
    %p197 = scmp.eq.s32.totalorder %s23, 1
    %p198 = por %p196, %p197
    %p200 = scmp.ne.s32.totalorder %s185, %s199
    %p201 = scmp.eq.s32.totalorder %s23, 0
    %p202 = por %p200, %p201
    %s204 = sadd.s32 %s203, 1
    %p207 = scmp.eq.s32.totalorder %s17, 1
    %p208 = scmp.ne.s32.totalorder %s203, %s205
    %p209 = scmp.eq.s32.totalorder %s17, 0
    %p210 = por %p208, %p209
    %p211 = scmp.ne.s32.totalorder %s203, %s205
    %p212 = scmp.eq.s32.totalorder %s22, 1
    %p213 = por %p211, %p212
    %p214 = scmp.ne.s32.totalorder %s205, %s206
    %p215 = scmp.eq.s32.totalorder %s22, 0
    %p216 = por %p214, %p215
    %p217 = scmp.ne.s32.totalorder %s205, %s206
    %p218 = scmp.eq.s32.totalorder %s23, 1
    %p219 = por %p217, %p218
    %p221 = scmp.ne.s32.totalorder %s206, %s220
    %p222 = scmp.eq.s32.totalorder %s23, 0
    %p223 = por %p221, %p222
    %s225 = sadd.s32 %s224, 1
    %p228 = scmp.eq.s32.totalorder %s17, 1
    %p229 = scmp.ne.s32.totalorder %s224, %s226
    %p230 = scmp.eq.s32.totalorder %s17, 0
    %p231 = por %p229, %p230
    %p232 = scmp.ne.s32.totalorder %s224, %s226
    %p233 = scmp.eq.s32.totalorder %s22, 1
    %p234 = por %p232, %p233
    %p235 = scmp.ne.s32.totalorder %s226, %s227
    %p236 = scmp.eq.s32.totalorder %s22, 0
    %p237 = por %p235, %p236
    %p238 = scmp.ne.s32.totalorder %s226, %s227
    %p239 = scmp.eq.s32.totalorder %s23, 1
    %p240 = por %p238, %p239
    %p242 = scmp.ne.s32.totalorder %s227, %s241
    %p243 = scmp.eq.s32.totalorder %s23, 0
    %p244 = por %p242, %p243
    %s246 = sadd.s32 %s245, 1
    %p249 = scmp.eq.s32.totalorder %s17, 1
    %p250 = scmp.ne.s32.totalorder %s245, %s247
    %p251 = scmp.eq.s32.totalorder %s17, 0
    %p252 = por %p250, %p251
    %p253 = scmp.ne.s32.totalorder %s245, %s247
    %p254 = scmp.eq.s32.totalorder %s22, 1
    %p255 = por %p253, %p254
    %p256 = scmp.ne.s32.totalorder %s247, %s248
    %p257 = scmp.eq.s32.totalorder %s22, 0
    %p258 = por %p256, %p257
    %p259 = scmp.ne.s32.totalorder %s247, %s248
    %p260 = scmp.eq.s32.totalorder %s23, 1
    %p261 = por %p259, %p260
    %p263 = scmp.ne.s32.totalorder %s248, %s262
    %p264 = scmp.eq.s32.totalorder %s23, 0
    %p265 = por %p263, %p264
    %s266 = ssub.s32 %s17, %s24
    %p267 = scmp.eq.s32.totalorder %s266, 0
    %s269 = sadd.s32 %s268, 1
    %s270 = scalar_select %p267, %s268, %s269
    %p273 = pneg %p267
    %p274 = scmp.eq.s32.totalorder %s17, 1
    %p275 = por %p273, %p274
    %p276 = scmp.ne.s32.totalorder %s268, %s271
    %p277 = scmp.eq.s32.totalorder %s17, 0
    %p278 = por %p276, %p277
    %p279 = scmp.ne.s32.totalorder %s268, %s271
    %p280 = scmp.eq.s32.totalorder %s22, 1
    %p281 = por %p279, %p280
    %p282 = scmp.ne.s32.totalorder %s271, %s272
    %p283 = scmp.eq.s32.totalorder %s22, 0
    %p284 = por %p282, %p283
    %p285 = scmp.ne.s32.totalorder %s271, %s272
    %p286 = scmp.eq.s32.totalorder %s23, 1
    %p287 = por %p285, %p286
    %p289 = scmp.ne.s32.totalorder %s272, %s288
    %p290 = scmp.eq.s32.totalorder %s23, 0
    %p291 = por %p289, %p290
    %p292 = scmp.le.s32.totalorder 1, %s17
    %p293 = scmp.lt.s32.totalorder %s17, 3
    %p294 = pnand %p292, %p293
    %p295 = pneg %p294
    // Predicated region
    $region9: #{tpu_custom_call.1} parent=5 // pred_check
      _
    $region10: #{tpu_custom_call.1} parent=5 // pred_check_branch
      %297 = sbr.rel (%p294) target = $region12
    $region11: #{tpu_custom_call.1} parent=5 // pred_region
      %s298 = ssub.s32 %s17, 1
      // Predicated region
      $region13: #{tpu_custom_call.1} parent=11 // pred_check
        %p299 = pneg %p90
      $region14: #{tpu_custom_call.1} parent=11 // pred_check_branch
        %301 = sbr.rel (%p299) target = $region16
      $region15: #{tpu_custom_call.1} parent=11 // pred_region
        _
      $region16: #{tpu_custom_call.1} parent=11 // pred_fallthru
        _
      // Predicated region
      $region17: #{tpu_custom_call.1} parent=11 // pred_check
        %p302 = pneg %p111
      $region18: #{tpu_custom_call.1} parent=11 // pred_check_branch
        %304 = sbr.rel (%p302) target = $region20
      $region19: #{tpu_custom_call.1} parent=11 // pred_region
        _
      $region20: #{tpu_custom_call.1} parent=11 // pred_fallthru
        _
      // Predicated region
      $region21: #{tpu_custom_call.1} parent=11 // pred_check
        %p305 = pneg %p132
      $region22: #{tpu_custom_call.1} parent=11 // pred_check_branch
        %307 = sbr.rel (%p305) target = $region24
      $region23: #{tpu_custom_call.1} parent=11 // pred_region
        _
      $region24: #{tpu_custom_call.1} parent=11 // pred_fallthru
        _
      // Predicated region
      $region25: #{tpu_custom_call.1} parent=11 // pred_check
        %p308 = pneg %p153
      $region26: #{tpu_custom_call.1} parent=11 // pred_check_branch
        %310 = sbr.rel (%p308) target = $region28
      $region27: #{tpu_custom_call.1} parent=11 // pred_region
        _
      $region28: #{tpu_custom_call.1} parent=11 // pred_fallthru
        _
      // Predicated region
      $region29: #{tpu_custom_call.1} parent=11 // pred_check
        %p311 = pneg %p174
      $region30: #{tpu_custom_call.1} parent=11 // pred_check_branch
        %313 = sbr.rel (%p311) target = $region32
      $region31: #{tpu_custom_call.1} parent=11 // pred_region
        _
      $region32: #{tpu_custom_call.1} parent=11 // pred_fallthru
        _
      // Predicated region
      $region33: #{tpu_custom_call.1} parent=11 // pred_check
        %p314 = pneg %p195
      $region34: #{tpu_custom_call.1} parent=11 // pred_check_branch
        %316 = sbr.rel (%p314) target = $region36
      $region35: #{tpu_custom_call.1} parent=11 // pred_region
        _
      $region36: #{tpu_custom_call.1} parent=11 // pred_fallthru
        _
      // Predicated region
      $region37: #{tpu_custom_call.1} parent=11 // pred_check
        %p317 = pneg %p216
      $region38: #{tpu_custom_call.1} parent=11 // pred_check_branch
        %319 = sbr.rel (%p317) target = $region40
      $region39: #{tpu_custom_call.1} parent=11 // pred_region
        _
      $region40: #{tpu_custom_call.1} parent=11 // pred_fallthru
        _
      // Predicated region
      $region41: #{tpu_custom_call.1} parent=11 // pred_check
        %p320 = pneg %p237
      $region42: #{tpu_custom_call.1} parent=11 // pred_check_branch
        %322 = sbr.rel (%p320) target = $region44
      $region43: #{tpu_custom_call.1} parent=11 // pred_region
        _
      $region44: #{tpu_custom_call.1} parent=11 // pred_fallthru
        _
      // Predicated region
      $region45: #{tpu_custom_call.1} parent=11 // pred_check
        %p323 = pneg %p258
      $region46: #{tpu_custom_call.1} parent=11 // pred_check_branch
        %325 = sbr.rel (%p323) target = $region48
      $region47: #{tpu_custom_call.1} parent=11 // pred_region
        _
      $region48: #{tpu_custom_call.1} parent=11 // pred_fallthru
        _
    $region12: #{tpu_custom_call.1} parent=5 // pred_fallthru
      _
    %p326 = scmp.lt.s32.totalorder %s17, 2
    // Predicated region
    $region49: #{tpu_custom_call.1} parent=5 // pred_check
      %p327 = pneg %p326
    $region50: #{tpu_custom_call.1} parent=5 // pred_check_branch
      %329 = sbr.rel (%p327) target = $region52
    $region51: #{tpu_custom_call.1} parent=5 // pred_region
      // Predicated region
      $region53: #{tpu_custom_call.1} parent=51 // pred_check
        %p330 = pneg %p37
      $region54: #{tpu_custom_call.1} parent=51 // pred_check_branch
        %332 = sbr.rel (%p330) target = $region56
      $region55: #{tpu_custom_call.1} parent=51 // pred_region
        %s333 = smul.u32 16, %s17
        %p334 = scmp.lt.s32.totalorder %s333, 31
        %s335 = scalar_select %p334, %s333, 31
        %s336 = smul.addr %s335, 8
        %s337 = scalar_lea.vmem %s0, %s336
        %s338 = smul.u32 16, %s17
      $region56: #{tpu_custom_call.1} parent=51 // pred_fallthru
        _
      // Predicated region
      $region57: #{tpu_custom_call.1} parent=51 // pred_check
        %p339 = pneg %p63
      $region58: #{tpu_custom_call.1} parent=51 // pred_check_branch
        %341 = sbr.rel (%p339) target = $region60
      $region59: #{tpu_custom_call.1} parent=51 // pred_region
        %s342 = smul.u32 16, %s17
        %p343 = scmp.lt.s32.totalorder %s342, 31
        %s344 = scalar_select %p343, %s342, 31
        %s345 = smul.addr %s344, 8
        %s346 = scalar_lea.vmem %s1, %s345
        %s347 = smul.u32 16, %s17
      $region60: #{tpu_custom_call.1} parent=51 // pred_fallthru
        _
    $region52: #{tpu_custom_call.1} parent=5 // pred_fallthru
      _
    %p348 = scmp.le.s32.totalorder 1, %s17
    %p349 = scmp.lt.s32.totalorder %s17, 3
    %p350 = pnand %p348, %p349
    %p351 = pneg %p350
    // Predicated region
    $region61: #{tpu_custom_call.1} parent=5 // pred_check
      _
    $region62: #{tpu_custom_call.1} parent=5 // pred_check_branch
      %353 = sbr.rel (%p350) target = $region64
    $region63: #{tpu_custom_call.1} parent=5 // pred_region
      %s354 = ssub.s32 %s17, 1
      %s355 = smul.u32 16, %s22
      %p356 = scmp.lt.s32.totalorder %s355, 31
      %s357 = scalar_select %p356, %s355, 31
      %s358 = smul.addr %s357, 8
      %s359 = scalar_lea.vmem %s0, %s358
      %p360 = pneg %p43
      %p361 = pneg %p40
      %s362 = smul.u32 16, %s22
      %p363 = scmp.lt.s32.totalorder %s362, 31
      %s364 = scalar_select %p363, %s362, 31
      %s365 = smul.addr %s364, 8
      %s366 = scalar_lea.vmem %s1, %s365
      %p367 = pneg %p69
      %p368 = pneg %p66
      %p369 = pneg %p90
      %p370 = pneg %p87
      %p371 = pneg %p111
      %p372 = pneg %p108
      %p373 = pneg %p132
      %p374 = pneg %p129
      %p375 = pneg %p153
      %p376 = pneg %p150
      %p377 = pneg %p174
      %p378 = pneg %p171
      %p379 = pneg %p195
      %p380 = pneg %p192
      %p381 = pneg %p216
      %p382 = pneg %p213
      %p383 = pneg %p237
      %p384 = pneg %p234
      %p385 = pneg %p258
      %p386 = pneg %p255
      %p387 = pneg %p284
      %p388 = pneg %p281
      %s389 = smul.u32 16, %s22
      %p390 = scmp.lt.s32.totalorder %s389, 31
      %s391 = scalar_select %p390, %s389, 31
      %s392 = smul.addr %s391, 8
      %s393 = scalar_lea.vmem %s11, %s392
      %s394 = smul.u32 16, %s22
      %p395 = scmp.lt.s32.totalorder %s394, 31
      %s396 = scalar_select %p395, %s394, 31
      %s397 = smul.addr %s396, 8
      %s398 = scalar_lea.vmem %s0, %s397
      %s399 = smul.u32 16, %s22
      %s400 = smul.u32 16, %s22
      %p401 = scmp.lt.s32.totalorder %s400, 31
      %s402 = scalar_select %p401, %s400, 31
      %s403 = smul.addr %s402, 8
      %s404 = scalar_lea.vmem %s1, %s403
      %s405 = smul.u32 16, %s22
      %s406 = smul.u32 16, %s22
      %p407 = scmp.lt.s32.totalorder %s406, 31
      %s408 = scalar_select %p407, %s406, 31
      %s409 = smul.addr %s408, 8
      %s410 = scalar_lea.vmem %s11, %s409
      %s411 = smul.u32 16, %s22
      %v413 = vld [vmem:[%s398] sm:$0xff]
      %v414 = vld [vmem:[%s398 + $0x8] sm:$0xff]
      %v415 = vld [vmem:[%s398 + $0x10] sm:$0xff]
      %v416 = vld [vmem:[%s398 + $0x18] sm:$0xff]
      %v417 = vld [vmem:[%s398 + $0x20] sm:$0xff]
      %v418 = vld [vmem:[%s398 + $0x28] sm:$0xff]
      %v419 = vld [vmem:[%s398 + $0x30] sm:$0xff]
      %v420 = vld [vmem:[%s398 + $0x38] sm:$0xff]
      %v421 = vld [vmem:[%s398 + $0x40] sm:$0xff]
      %v422 = vld [vmem:[%s398 + $0x48] sm:$0xff]
      %v423 = vld [vmem:[%s398 + $0x50] sm:$0xff]
      %v424 = vld [vmem:[%s398 + $0x58] sm:$0xff]
      %v425 = vld [vmem:[%s398 + $0x60] sm:$0xff]
      %v426 = vld [vmem:[%s398 + $0x68] sm:$0xff]
      %v427 = vld [vmem:[%s398 + $0x70] sm:$0xff]
      %v428 = vld [vmem:[%s398 + $0x78] sm:$0xff]
      %v429 = vpack.c.bf16 %v414, %v413
      %v430 = vpack.c.bf16 %v416, %v415
      %v431 = vpack.c.bf16 %v418, %v417
      %v432 = vpack.c.bf16 %v420, %v419
      %v433 = vpack.c.bf16 %v422, %v421
      %v434 = vpack.c.bf16 %v424, %v423
      %v435 = vpack.c.bf16 %v426, %v425
      %v436 = vpack.c.bf16 %v428, %v427
      %v437 = vld [vmem:[%s404] sm:$0xff]
      %v438 = vld [vmem:[%s404 + $0x8] sm:$0xff]
      %v439 = vld [vmem:[%s404 + $0x10] sm:$0xff]
      %v440 = vld [vmem:[%s404 + $0x18] sm:$0xff]
      %v441 = vld [vmem:[%s404 + $0x20] sm:$0xff]
      %v442 = vld [vmem:[%s404 + $0x28] sm:$0xff]
      %v443 = vld [vmem:[%s404 + $0x30] sm:$0xff]
      %v444 = vld [vmem:[%s404 + $0x38] sm:$0xff]
      %v445 = vld [vmem:[%s404 + $0x40] sm:$0xff]
      %v446 = vld [vmem:[%s404 + $0x48] sm:$0xff]
      %v447 = vld [vmem:[%s404 + $0x50] sm:$0xff]
      %v448 = vld [vmem:[%s404 + $0x58] sm:$0xff]
      %v449 = vld [vmem:[%s404 + $0x60] sm:$0xff]
      %v450 = vld [vmem:[%s404 + $0x68] sm:$0xff]
      %v451 = vld [vmem:[%s404 + $0x70] sm:$0xff]
      %v452 = vld [vmem:[%s404 + $0x78] sm:$0xff]
      %v453 = vpack.c.bf16 %v438, %v437
      %v454 = vpack.c.bf16 %v440, %v439
      %v455 = vpack.c.bf16 %v442, %v441
      %v456 = vpack.c.bf16 %v444, %v443
      %v457 = vpack.c.bf16 %v446, %v445
      %v458 = vpack.c.bf16 %v448, %v447
      %v459 = vpack.c.bf16 %v450, %v449
      %v460 = vpack.c.bf16 %v452, %v451
      %v461 = vld [vmem:[%s2] sm:$0xff]
      %v462 = vld [vmem:[%s3] sm:$0x3]
      %v464 = vlaneseq
      %v465 = vshrl.u32 %v464, 7
      %v466 = vsub.s32 0, %v465
      %v467 = vrot.slane %v462, %v466
      %v468 = vlaneseq
      %v469 = vshrl.u32 %v468, 7
      %v470 = vsub.s32 1, %v469
      %v471 = vrot.slane %v462, %v470
      %v475 = vunpack.c.l.b16 %v461
      %v476 = vunpack.c.h.b16 %v461
      %v477 = vpack.c.b16 %v475, %v475
      %v478 = vpack.c.b16 %v476, %v476
      %vm479 = vcmask 64512
      %v481 = vsel %vm479, %v429, 0
      %v484 = vsel %vm479, %v430, 0
      %v487 = vsel %vm479, %v431, 0
      %v490 = vsel %vm479, %v432, 0
      %v493 = vsel %vm479, %v433, 0
      %v496 = vsel %vm479, %v434, 0
      %v499 = vsel %vm479, %v435, 0
      %v502 = vsel %vm479, %v436, 0
      %vm504 = vcmask 1043456
      %v506 = vsel %vm504, %v477, 0
      %v509 = vsel %vm504, %v478, 0
      %511 = vmatprep.subr.bf16.mxu0 %v509
      %512 = vmatpush1.bf16.msra.mxu0 %v506
      %513 = vmatprep.subr.bf16.mxu0 0
      %514 = vmatpush1.bf16.msra.mxu0 0
      %515 = vmatprep.subr.bf16.mxu0 0
      %516 = vmatpush1.bf16.msra.mxu0 0
      %517 = vmatprep.subr.bf16.mxu0 0
      %518 = vmatpush1.bf16.msra.mxu0 0
      %519 = vmatprep.subr.bf16.mxu0 0
      %520 = vmatpush1.bf16.msra.mxu0 0
      %521 = vmatprep.subr.bf16.mxu0 0
      %522 = vmatpush1.bf16.msra.mxu0 0
      %523 = vmatprep.subr.bf16.mxu0 0
      %524 = vmatpush1.bf16.msra.mxu0 0
      %525 = vmatprep.subr.bf16.mxu0 0
      %526 = vmatpush1.bf16.msra.mxu0 0
      %527 = vmatprep.subr.bf16.mxu0 0
      %528 = vmatpush1.bf16.msra.mxu0 0
      %529 = vmatprep.subr.bf16.mxu0 0
      %530 = vmatpush1.bf16.msra.mxu0 0
      %531 = vmatprep.subr.bf16.mxu0 0
      %532 = vmatpush1.bf16.msra.mxu0 0
      %533 = vmatprep.subr.bf16.mxu0 0
      %534 = vmatpush1.bf16.msra.mxu0 0
      %535 = vmatprep.subr.bf16.mxu0 0
      %536 = vmatpush1.bf16.msra.mxu0 0
      %537 = vmatprep.subr.bf16.mxu0 0
      %538 = vmatpush1.bf16.msra.mxu0 0
      %539 = vmatprep.subr.bf16.mxu0 0
      %540 = vmatpush1.bf16.msra.mxu0 0
      %541 = vmatprep.subr.bf16.mxu0 0
      %542 = vmatpush1.bf16.msra.mxu0 0
      %543 = vmatprep.mubr.bf16.mxu0 0
      %544 = vmatmul.mubr.bf16.gmra.mrb[0].mxu0 %v481
      %v545 = vpop.f32.mrb[0].mxu0
      %v546 = vadd.f32 %v467, %v545
      %v547 = vpop.f32.mrb[0].mxu0
      %v548 = vadd.f32 %v471, %v547
      %v549 = vpop.f32.mrb[0].mxu0
      %v550 = vadd.f32 %v467, %v549
      %v551 = vpop.f32.mrb[0].mxu0
      %v552 = vadd.f32 %v471, %v551
      %553 = vmatprep.mubr.bf16.mxu0 0
      %554 = vmatmul.mubr.bf16.gmra.mrb[0].mxu0 %v484
      %v555 = vpop.f32.mrb[0].mxu0
      %v556 = vadd.f32 %v467, %v555
      %v557 = vpop.f32.mrb[0].mxu0
      %v558 = vadd.f32 %v471, %v557
      %v559 = vpop.f32.mrb[0].mxu0
      %v560 = vadd.f32 %v467, %v559
      %v561 = vpop.f32.mrb[0].mxu0
      %v562 = vadd.f32 %v471, %v561
      %563 = vmatprep.mubr.bf16.mxu0 0
      %564 = vmatmul.mubr.bf16.gmra.mrb[0].mxu0 %v487
      %v565 = vpop.f32.mrb[0].mxu0
      %v566 = vadd.f32 %v467, %v565
      %v567 = vpop.f32.mrb[0].mxu0
      %v568 = vadd.f32 %v471, %v567
      %v569 = vpop.f32.mrb[0].mxu0
      %v570 = vadd.f32 %v467, %v569
      %v571 = vpop.f32.mrb[0].mxu0
      %v572 = vadd.f32 %v471, %v571
      %573 = vmatprep.mubr.bf16.mxu0 0
      %574 = vmatmul.mubr.bf16.gmra.mrb[0].mxu0 %v490
      %v575 = vpop.f32.mrb[0].mxu0
      %v576 = vadd.f32 %v467, %v575
      %v577 = vpop.f32.mrb[0].mxu0
      %v578 = vadd.f32 %v471, %v577
      %v579 = vpop.f32.mrb[0].mxu0
      %v580 = vadd.f32 %v467, %v579
      %v581 = vpop.f32.mrb[0].mxu0
      %v582 = vadd.f32 %v471, %v581
      %583 = vmatprep.mubr.bf16.mxu0 0
      %584 = vmatmul.mubr.bf16.gmra.mrb[0].mxu0 %v493
      %v585 = vpop.f32.mrb[0].mxu0
      %v586 = vadd.f32 %v467, %v585
      %v587 = vpop.f32.mrb[0].mxu0
      %v588 = vadd.f32 %v471, %v587
      %v589 = vpop.f32.mrb[0].mxu0
      %v590 = vadd.f32 %v467, %v589
      %v591 = vpop.f32.mrb[0].mxu0
      %v592 = vadd.f32 %v471, %v591
      %593 = vmatprep.mubr.bf16.mxu0 0
      %594 = vmatmul.mubr.bf16.gmra.mrb[0].mxu0 %v496
      %v595 = vpop.f32.mrb[0].mxu0
      %v596 = vadd.f32 %v467, %v595
      %v597 = vpop.f32.mrb[0].mxu0
      %v598 = vadd.f32 %v471, %v597
      %v599 = vpop.f32.mrb[0].mxu0
      %v600 = vadd.f32 %v467, %v599
      %v601 = vpop.f32.mrb[0].mxu0
      %v602 = vadd.f32 %v471, %v601
      %603 = vmatprep.mubr.bf16.mxu0 0
      %604 = vmatmul.mubr.bf16.gmra.mrb[0].mxu0 %v499
      %v605 = vpop.f32.mrb[0].mxu0
      %v606 = vadd.f32 %v467, %v605
      %v607 = vpop.f32.mrb[0].mxu0
      %v608 = vadd.f32 %v471, %v607
      %v609 = vpop.f32.mrb[0].mxu0
      %v610 = vadd.f32 %v467, %v609
      %v611 = vpop.f32.mrb[0].mxu0
      %v612 = vadd.f32 %v471, %v611
      %613 = vmatprep.mubr.bf16.mxu0 0
      %614 = vmatmul.mubr.bf16.gmra.mrb[0].mxu0 %v502
      %v615 = vpop.f32.mrb[0].mxu0
      %v616 = vadd.f32 %v467, %v615
      %v617 = vpop.f32.mrb[0].mxu0
      %v618 = vadd.f32 %v471, %v617
      %v619 = vpop.f32.mrb[0].mxu0
      %v620 = vadd.f32 %v467, %v619
      %v621 = vpop.f32.mrb[0].mxu0
      %v622 = vadd.f32 %v471, %v621
      %623 = vdwg.mxu0
      %v624 = vmax.f32 %v546, 0.0
      %v625 = vmax.f32 %v548, 0.0
      %v626 = vmax.f32 %v550, 0.0
      %v627 = vmax.f32 %v552, 0.0
      %v628 = vmax.f32 %v556, 0.0
      %v629 = vmax.f32 %v558, 0.0
      %v630 = vmax.f32 %v560, 0.0
      %v631 = vmax.f32 %v562, 0.0
      %v632 = vmax.f32 %v566, 0.0
      %v633 = vmax.f32 %v568, 0.0
      %v634 = vmax.f32 %v570, 0.0
      %v635 = vmax.f32 %v572, 0.0
      %v636 = vmax.f32 %v576, 0.0
      %v637 = vmax.f32 %v578, 0.0
      %v638 = vmax.f32 %v580, 0.0
      %v639 = vmax.f32 %v582, 0.0
      %v640 = vmax.f32 %v586, 0.0
      %v641 = vmax.f32 %v588, 0.0
      %v642 = vmax.f32 %v590, 0.0
      %v643 = vmax.f32 %v592, 0.0
      %v644 = vmax.f32 %v596, 0.0
      %v645 = vmax.f32 %v598, 0.0
      %v646 = vmax.f32 %v600, 0.0
      %v647 = vmax.f32 %v602, 0.0
      %v648 = vmax.f32 %v606, 0.0
      %v649 = vmax.f32 %v608, 0.0
      %v650 = vmax.f32 %v610, 0.0
      %v651 = vmax.f32 %v612, 0.0
      %v652 = vmax.f32 %v616, 0.0
      %v653 = vmax.f32 %v618, 0.0
      %v654 = vmax.f32 %v620, 0.0
      %v655 = vmax.f32 %v622, 0.0
      %v656 = vld [vmem:[%s4] sm:$0xff]
      %v657 = vld [vmem:[%s5] sm:$0x3]
      %v659 = vlaneseq
      %v660 = vshrl.u32 %v659, 7
      %v661 = vsub.s32 0, %v660
      %v662 = vrot.slane %v657, %v661
      %v663 = vlaneseq
      %v664 = vshrl.u32 %v663, 7
      %v665 = vsub.s32 1, %v664
      %v666 = vrot.slane %v657, %v665
      %v670 = vunpack.c.l.b16 %v656
      %v671 = vunpack.c.h.b16 %v656
      %v672 = vpack.c.b16 %v670, %v670
      %v673 = vpack.c.b16 %v671, %v671
      %v675 = vsel %vm479, %v453, 0
      %v678 = vsel %vm479, %v454, 0
      %v681 = vsel %vm479, %v455, 0
      %v684 = vsel %vm479, %v456, 0
      %v687 = vsel %vm479, %v457, 0
      %v690 = vsel %vm479, %v458, 0
      %v693 = vsel %vm479, %v459, 0
      %v696 = vsel %vm479, %v460, 0
      %v699 = vsel %vm504, %v672, 0
      %v702 = vsel %vm504, %v673, 0
      %704 = vmatprep.subr.bf16.mxu0 %v702
      %705 = vmatpush1.bf16.msra.mxu0 %v699
      %706 = vmatprep.subr.bf16.mxu0 0
      %707 = vmatpush1.bf16.msra.mxu0 0
      %708 = vmatprep.subr.bf16.mxu0 0
      %709 = vmatpush1.bf16.msra.mxu0 0
      %710 = vmatprep.subr.bf16.mxu0 0
      %711 = vmatpush1.bf16.msra.mxu0 0
      %712 = vmatprep.subr.bf16.mxu0 0
      %713 = vmatpush1.bf16.msra.mxu0 0
      %714 = vmatprep.subr.bf16.mxu0 0
      %715 = vmatpush1.bf16.msra.mxu0 0
      %716 = vmatprep.subr.bf16.mxu0 0
      %717 = vmatpush1.bf16.msra.mxu0 0
      %718 = vmatprep.subr.bf16.mxu0 0
      %719 = vmatpush1.bf16.msra.mxu0 0
      %720 = vmatprep.subr.bf16.mxu0 0
      %721 = vmatpush1.bf16.msra.mxu0 0
      %722 = vmatprep.subr.bf16.mxu0 0
      %723 = vmatpush1.bf16.msra.mxu0 0
      %724 = vmatprep.subr.bf16.mxu0 0
      %725 = vmatpush1.bf16.msra.mxu0 0
      %726 = vmatprep.subr.bf16.mxu0 0
      %727 = vmatpush1.bf16.msra.mxu0 0
      %728 = vmatprep.subr.bf16.mxu0 0
      %729 = vmatpush1.bf16.msra.mxu0 0
      %730 = vmatprep.subr.bf16.mxu0 0
      %731 = vmatpush1.bf16.msra.mxu0 0
      %732 = vmatprep.subr.bf16.mxu0 0
      %733 = vmatpush1.bf16.msra.mxu0 0
      %734 = vmatprep.subr.bf16.mxu0 0
      %735 = vmatpush1.bf16.msra.mxu0 0
      %736 = vmatprep.mubr.bf16.mxu0 0
      %737 = vmatmul.mubr.bf16.gmra.mrb[0].mxu0 %v675
      %v738 = vpop.f32.mrb[0].mxu0
      %v739 = vadd.f32 %v662, %v738
      %v740 = vpop.f32.mrb[0].mxu0
      %v741 = vadd.f32 %v666, %v740
      %v742 = vpop.f32.mrb[0].mxu0
      %v743 = vadd.f32 %v662, %v742
      %v744 = vpop.f32.mrb[0].mxu0
      %v745 = vadd.f32 %v666, %v744
      %746 = vmatprep.mubr.bf16.mxu0 0
      %747 = vmatmul.mubr.bf16.gmra.mrb[0].mxu0 %v678
      %v748 = vpop.f32.mrb[0].mxu0
      %v749 = vadd.f32 %v662, %v748
      %v750 = vpop.f32.mrb[0].mxu0
      %v751 = vadd.f32 %v666, %v750
      %v752 = vpop.f32.mrb[0].mxu0
      %v753 = vadd.f32 %v662, %v752
      %v754 = vpop.f32.mrb[0].mxu0
      %v755 = vadd.f32 %v666, %v754
      %756 = vmatprep.mubr.bf16.mxu0 0
      %757 = vmatmul.mubr.bf16.gmra.mrb[0].mxu0 %v681
      %v758 = vpop.f32.mrb[0].mxu0
      %v759 = vadd.f32 %v662, %v758
      %v760 = vpop.f32.mrb[0].mxu0
      %v761 = vadd.f32 %v666, %v760
      %v762 = vpop.f32.mrb[0].mxu0
      %v763 = vadd.f32 %v662, %v762
      %v764 = vpop.f32.mrb[0].mxu0
      %v765 = vadd.f32 %v666, %v764
      %766 = vmatprep.mubr.bf16.mxu0 0
      %767 = vmatmul.mubr.bf16.gmra.mrb[0].mxu0 %v684
      %v768 = vpop.f32.mrb[0].mxu0
      %v769 = vadd.f32 %v662, %v768
      %v770 = vpop.f32.mrb[0].mxu0
      %v771 = vadd.f32 %v666, %v770
      %v772 = vpop.f32.mrb[0].mxu0
      %v773 = vadd.f32 %v662, %v772
      %v774 = vpop.f32.mrb[0].mxu0
      %v775 = vadd.f32 %v666, %v774
      %776 = vmatprep.mubr.bf16.mxu0 0
      %777 = vmatmul.mubr.bf16.gmra.mrb[0].mxu0 %v687
      %v778 = vpop.f32.mrb[0].mxu0
      %v779 = vadd.f32 %v662, %v778
      %v780 = vpop.f32.mrb[0].mxu0
      %v781 = vadd.f32 %v666, %v780
      %v782 = vpop.f32.mrb[0].mxu0
      %v783 = vadd.f32 %v662, %v782
      %v784 = vpop.f32.mrb[0].mxu0
      %v785 = vadd.f32 %v666, %v784
      %786 = vmatprep.mubr.bf16.mxu0 0
      %787 = vmatmul.mubr.bf16.gmra.mrb[0].mxu0 %v690
      %v788 = vpop.f32.mrb[0].mxu0
      %v789 = vadd.f32 %v662, %v788
      %v790 = vpop.f32.mrb[0].mxu0
      %v791 = vadd.f32 %v666, %v790
      %v792 = vpop.f32.mrb[0].mxu0
      %v793 = vadd.f32 %v662, %v792
      %v794 = vpop.f32.mrb[0].mxu0
      %v795 = vadd.f32 %v666, %v794
      %796 = vmatprep.mubr.bf16.mxu0 0
      %797 = vmatmul.mubr.bf16.gmra.mrb[0].mxu0 %v693
      %v798 = vpop.f32.mrb[0].mxu0
      %v799 = vadd.f32 %v662, %v798
      %v800 = vpop.f32.mrb[0].mxu0
      %v801 = vadd.f32 %v666, %v800
      %v802 = vpop.f32.mrb[0].mxu0
      %v803 = vadd.f32 %v662, %v802
      %v804 = vpop.f32.mrb[0].mxu0
      %v805 = vadd.f32 %v666, %v804
      %806 = vmatprep.mubr.bf16.mxu0 0
      %807 = vmatmul.mubr.bf16.gmra.mrb[0].mxu0 %v696
      %v808 = vpop.f32.mrb[0].mxu0
      %v809 = vadd.f32 %v662, %v808
      %v810 = vpop.f32.mrb[0].mxu0
      %v811 = vadd.f32 %v666, %v810
      %v812 = vpop.f32.mrb[0].mxu0
      %v813 = vadd.f32 %v662, %v812
      %v814 = vpop.f32.mrb[0].mxu0
      %v815 = vadd.f32 %v666, %v814
      %816 = vdwg.mxu0
      %v817 = vmax.f32 %v739, 0.0
      %v818 = vmax.f32 %v741, 0.0
      %v819 = vmax.f32 %v743, 0.0
      %v820 = vmax.f32 %v745, 0.0
      %v821 = vmax.f32 %v749, 0.0
      %v822 = vmax.f32 %v751, 0.0
      %v823 = vmax.f32 %v753, 0.0
      %v824 = vmax.f32 %v755, 0.0
      %v825 = vmax.f32 %v759, 0.0
      %v826 = vmax.f32 %v761, 0.0
      %v827 = vmax.f32 %v763, 0.0
      %v828 = vmax.f32 %v765, 0.0
      %v829 = vmax.f32 %v769, 0.0
      %v830 = vmax.f32 %v771, 0.0
      %v831 = vmax.f32 %v773, 0.0
      %v832 = vmax.f32 %v775, 0.0
      %v833 = vmax.f32 %v779, 0.0
      %v834 = vmax.f32 %v781, 0.0
      %v835 = vmax.f32 %v783, 0.0
      %v836 = vmax.f32 %v785, 0.0
      %v837 = vmax.f32 %v789, 0.0
      %v838 = vmax.f32 %v791, 0.0
      %v839 = vmax.f32 %v793, 0.0
      %v840 = vmax.f32 %v795, 0.0
      %v841 = vmax.f32 %v799, 0.0
      %v842 = vmax.f32 %v801, 0.0
      %v843 = vmax.f32 %v803, 0.0
      %v844 = vmax.f32 %v805, 0.0
      %v845 = vmax.f32 %v809, 0.0
      %v846 = vmax.f32 %v811, 0.0
      %v847 = vmax.f32 %v813, 0.0
      %v848 = vmax.f32 %v815, 0.0
      %v849 = vpack.c.bf16 %v626, %v624
      %v850 = vpack.c.bf16 %v627, %v625
      %v851 = vpack.c.bf16 %v630, %v628
      %v852 = vpack.c.bf16 %v631, %v629
      %v853 = vpack.c.bf16 %v634, %v632
      %v854 = vpack.c.bf16 %v635, %v633
      %v855 = vpack.c.bf16 %v638, %v636
      %v856 = vpack.c.bf16 %v639, %v637
      %v857 = vpack.c.bf16 %v642, %v640
      %v858 = vpack.c.bf16 %v643, %v641
      %v859 = vpack.c.bf16 %v646, %v644
      %v860 = vpack.c.bf16 %v647, %v645
      %v861 = vpack.c.bf16 %v650, %v648
      %v862 = vpack.c.bf16 %v651, %v649
      %v863 = vpack.c.bf16 %v654, %v652
      %v864 = vpack.c.bf16 %v655, %v653
      %v865 = vld [vmem:[%s6] sm:$0xf]
      %v866 = vld [vmem:[%s6 + $0x4] sm:$0xf]
      %v867 = vld [vmem:[%s6 + $0x8] sm:$0xf]
      %v868 = vld [vmem:[%s6 + $0xc] sm:$0xf]
      %v869 = vld [vmem:[%s6 + $0x10] sm:$0xf]
      %v870 = vld [vmem:[%s6 + $0x14] sm:$0xf]
      %v871 = vld [vmem:[%s6 + $0x18] sm:$0xf]
      %v872 = vld [vmem:[%s6 + $0x1c] sm:$0xf]
      %v873 = vld [vmem:[%s6 + $0x20] sm:$0xf]
      %v874 = vld [vmem:[%s6 + $0x24] sm:$0xf]
      %v875 = vld [vmem:[%s6 + $0x28] sm:$0xf]
      %v876 = vld [vmem:[%s6 + $0x2c] sm:$0xf]
      %v877 = vld [vmem:[%s6 + $0x30] sm:$0xf]
      %v878 = vld [vmem:[%s6 + $0x34] sm:$0xf]
      %v879 = vld [vmem:[%s6 + $0x38] sm:$0xf]
      %v880 = vld [vmem:[%s6 + $0x3c] sm:$0xf]
      %v881 = vld [vmem:[%s6 + $0x40] sm:$0xf]
      %v882 = vld [vmem:[%s6 + $0x44] sm:$0xf]
      %v883 = vld [vmem:[%s6 + $0x48] sm:$0xf]
      %v884 = vld [vmem:[%s6 + $0x4c] sm:$0xf]
      %v885 = vld [vmem:[%s6 + $0x50] sm:$0xf]
      %v886 = vld [vmem:[%s6 + $0x54] sm:$0xf]
      %v887 = vld [vmem:[%s6 + $0x58] sm:$0xf]
      %v888 = vld [vmem:[%s6 + $0x5c] sm:$0xf]
      %v889 = vld [vmem:[%s6 + $0x60] sm:$0xf]
      %v890 = vpack.c.bf16 %v819, %v817
      %v891 = vpack.c.bf16 %v820, %v818
      %v892 = vpack.c.bf16 %v823, %v821
      %v893 = vpack.c.bf16 %v824, %v822
      %v894 = vpack.c.bf16 %v827, %v825
      %v895 = vpack.c.bf16 %v828, %v826
      %v896 = vpack.c.bf16 %v831, %v829
      %v897 = vpack.c.bf16 %v832, %v830
      %v898 = vpack.c.bf16 %v835, %v833
      %v899 = vpack.c.bf16 %v836, %v834
      %v900 = vpack.c.bf16 %v839, %v837
      %v901 = vpack.c.bf16 %v840, %v838
      %v902 = vpack.c.bf16 %v843, %v841
      %v903 = vpack.c.bf16 %v844, %v842
      %v904 = vpack.c.bf16 %v847, %v845
      %v905 = vpack.c.bf16 %v848, %v846
      %v906 = vld [vmem:[%s7] sm:$0xf]
      %v907 = vld [vmem:[%s7 + $0x4] sm:$0xf]
      %v908 = vld [vmem:[%s7 + $0x8] sm:$0xf]
      %v909 = vld [vmem:[%s7 + $0xc] sm:$0xf]
      %v910 = vld [vmem:[%s7 + $0x10] sm:$0xf]
      %v911 = vld [vmem:[%s7 + $0x14] sm:$0xf]
      %v912 = vld [vmem:[%s7 + $0x18] sm:$0xf]
      %v913 = vld [vmem:[%s7 + $0x1c] sm:$0xf]
      %v914 = vld [vmem:[%s7 + $0x20] sm:$0xf]
      %v915 = vld [vmem:[%s7 + $0x24] sm:$0xf]
      %v916 = vld [vmem:[%s7 + $0x28] sm:$0xf]
      %v917 = vld [vmem:[%s7 + $0x2c] sm:$0xf]
      %v918 = vld [vmem:[%s7 + $0x30] sm:$0xf]
      %v919 = vld [vmem:[%s7 + $0x34] sm:$0xf]
      %v920 = vld [vmem:[%s7 + $0x38] sm:$0xf]
      %v921 = vld [vmem:[%s7 + $0x3c] sm:$0xf]
      %v922 = vld [vmem:[%s7 + $0x40] sm:$0xf]
      %v923 = vld [vmem:[%s7 + $0x44] sm:$0xf]
      %v924 = vld [vmem:[%s7 + $0x48] sm:$0xf]
      %v925 = vld [vmem:[%s7 + $0x4c] sm:$0xf]
      %v926 = vld [vmem:[%s7 + $0x50] sm:$0xf]
      %v927 = vld [vmem:[%s7 + $0x54] sm:$0xf]
      %v928 = vld [vmem:[%s7 + $0x58] sm:$0xf]
      %v929 = vld [vmem:[%s7 + $0x5c] sm:$0xf]
      %v930 = vld [vmem:[%s7 + $0x60] sm:$0xf]
      %v956 = vunpack.c.l.b16 %v906
      %v957 = vunpack.c.l.b16 %v907
      %v958 = vunpack.c.l.b16 %v908
      %v959 = vunpack.c.l.b16 %v909
      %v960 = vunpack.c.l.b16 %v910
      %v961 = vunpack.c.l.b16 %v911
      %v962 = vunpack.c.l.b16 %v912
      %v963 = vunpack.c.l.b16 %v913
      %v964 = vunpack.c.l.b16 %v914
      %v965 = vunpack.c.l.b16 %v915
      %v966 = vunpack.c.l.b16 %v916
      %v967 = vunpack.c.l.b16 %v917
      %v968 = vunpack.c.l.b16 %v918
      %v969 = vunpack.c.l.b16 %v919
      %v970 = vunpack.c.l.b16 %v920
      %v971 = vunpack.c.l.b16 %v921
      %v972 = vunpack.c.l.b16 %v922
      %v973 = vunpack.c.l.b16 %v923
      %v974 = vunpack.c.l.b16 %v924
      %v975 = vunpack.c.l.b16 %v925
      %v976 = vunpack.c.l.b16 %v926
      %v977 = vunpack.c.l.b16 %v927
      %v978 = vunpack.c.l.b16 %v928
      %v979 = vunpack.c.l.b16 %v929
      %v980 = vunpack.c.l.b16 %v930
      %v981 = vpack.c.b16 %v957, %v956
      %v982 = vpack.c.b16 %v959, %v958
      %v983 = vpack.c.b16 %v961, %v960
      %v984 = vpack.c.b16 %v963, %v962
      %v985 = vpack.c.b16 %v965, %v964
      %v986 = vpack.c.b16 %v967, %v966
      %v987 = vpack.c.b16 %v969, %v968
      %v988 = vpack.c.b16 %v971, %v970
      %v989 = vpack.c.b16 %v973, %v972
      %v990 = vpack.c.b16 %v975, %v974
      %v991 = vpack.c.b16 %v977, %v976
      %v992 = vpack.c.b16 %v979, %v978
      %v993 = vpack.c.b16 %v980, %v980
      %vm1006 = vcmask 588800
      %v1008 = vsel %vm1006, %v891, 0
      %v1011 = vsel %vm1006, %v893, 0
      %v1014 = vsel %vm1006, %v895, 0
      %v1017 = vsel %vm1006, %v897, 0
      %v1020 = vsel %vm1006, %v899, 0
      %v1023 = vsel %vm1006, %v901, 0
      %v1026 = vsel %vm1006, %v903, 0
      %v1029 = vsel %vm1006, %v905, 0
      %v1032 = vsel %vm504, %v993, 0
      %1034 = vmatprep.subr.bf16.mxu0 0
      %1035 = vmatpush1.bf16.msra.mxu0 %v981
      %1036 = vmatprep.subr.bf16.mxu0 0
      %1037 = vmatpush1.bf16.msra.mxu0 %v982
      %1038 = vmatprep.subr.bf16.mxu0 0
      %1039 = vmatpush1.bf16.msra.mxu0 %v983
      %1040 = vmatprep.subr.bf16.mxu0 0
      %1041 = vmatpush1.bf16.msra.mxu0 %v984
      %1042 = vmatprep.subr.bf16.mxu0 0
      %1043 = vmatpush1.bf16.msra.mxu0 %v985
      %1044 = vmatprep.subr.bf16.mxu0 0
      %1045 = vmatpush1.bf16.msra.mxu0 %v986
      %1046 = vmatprep.subr.bf16.mxu0 0
      %1047 = vmatpush1.bf16.msra.mxu0 %v987
      %1048 = vmatprep.subr.bf16.mxu0 0
      %1049 = vmatpush1.bf16.msra.mxu0 %v988
      %1050 = vmatprep.subr.bf16.mxu0 0
      %1051 = vmatpush1.bf16.msra.mxu0 %v989
      %1052 = vmatprep.subr.bf16.mxu0 0
      %1053 = vmatpush1.bf16.msra.mxu0 %v990
      %1054 = vmatprep.subr.bf16.mxu0 0
      %1055 = vmatpush1.bf16.msra.mxu0 %v991
      %1056 = vmatprep.subr.bf16.mxu0 0
      %1057 = vmatpush1.bf16.msra.mxu0 %v992
      %1058 = vmatprep.subr.bf16.mxu0 0
      %1059 = vmatpush1.bf16.msra.mxu0 %v1032
      %1060 = vmatprep.subr.bf16.mxu0 0
      %1061 = vmatpush1.bf16.msra.mxu0 0
      %1062 = vmatprep.subr.bf16.mxu0 0
      %1063 = vmatpush1.bf16.msra.mxu0 0
      %1064 = vmatprep.subr.bf16.mxu0 0
      %1065 = vmatpush1.bf16.msra.mxu0 0
      %1066 = vmatprep.mubr.bf16.mxu0 %v1008
      %1067 = vmatmul.mubr.bf16.gmra.mrb[0].mxu0 %v890
      %v1068 = vpop.f32.mrb[0].mxu0
      %v1069 = vadd.f32 0.0, %v1068
      %v1070 = vpop.f32.mrb[0].mxu0
      %v1071 = vpop.f32.mrb[0].mxu0
      %v1072 = vadd.f32 0.0, %v1071
      %v1073 = vpop.f32.mrb[0].mxu0
      %1074 = vmatprep.mubr.bf16.mxu0 %v1011
      %1075 = vmatmul.mubr.bf16.gmra.mrb[0].mxu0 %v892
      %v1076 = vpop.f32.mrb[0].mxu0
      %v1077 = vadd.f32 0.0, %v1076
      %v1078 = vpop.f32.mrb[0].mxu0
      %v1079 = vpop.f32.mrb[0].mxu0
      %v1080 = vadd.f32 0.0, %v1079
      %v1081 = vpop.f32.mrb[0].mxu0
      %1082 = vmatprep.mubr.bf16.mxu0 %v1014
      %1083 = vmatmul.mubr.bf16.gmra.mrb[0].mxu0 %v894
      %v1084 = vpop.f32.mrb[0].mxu0
      %v1085 = vadd.f32 0.0, %v1084
      %v1086 = vpop.f32.mrb[0].mxu0
      %v1087 = vpop.f32.mrb[0].mxu0
      %v1088 = vadd.f32 0.0, %v1087
      %v1089 = vpop.f32.mrb[0].mxu0
      %1090 = vmatprep.mubr.bf16.mxu0 %v1017
      %1091 = vmatmul.mubr.bf16.gmra.mrb[0].mxu0 %v896
      %v1092 = vpop.f32.mrb[0].mxu0
      %v1093 = vadd.f32 0.0, %v1092
      %v1094 = vpop.f32.mrb[0].mxu0
      %v1095 = vpop.f32.mrb[0].mxu0
      %v1096 = vadd.f32 0.0, %v1095
      %v1097 = vpop.f32.mrb[0].mxu0
      %1098 = vmatprep.mubr.bf16.mxu0 %v1020
      %1099 = vmatmul.mubr.bf16.gmra.mrb[0].mxu0 %v898
      %v1100 = vpop.f32.mrb[0].mxu0
      %v1101 = vadd.f32 0.0, %v1100
      %v1102 = vpop.f32.mrb[0].mxu0
      %v1103 = vpop.f32.mrb[0].mxu0
      %v1104 = vadd.f32 0.0, %v1103
      %v1105 = vpop.f32.mrb[0].mxu0
      %1106 = vmatprep.mubr.bf16.mxu0 %v1023
      %1107 = vmatmul.mubr.bf16.gmra.mrb[0].mxu0 %v900
      %v1108 = vpop.f32.mrb[0].mxu0
      %v1109 = vadd.f32 0.0, %v1108
      %v1110 = vpop.f32.mrb[0].mxu0
      %v1111 = vpop.f32.mrb[0].mxu0
      %v1112 = vadd.f32 0.0, %v1111
      %v1113 = vpop.f32.mrb[0].mxu0
      %1114 = vmatprep.mubr.bf16.mxu0 %v1026
      %1115 = vmatmul.mubr.bf16.gmra.mrb[0].mxu0 %v902
      %v1116 = vpop.f32.mrb[0].mxu0
      %v1117 = vadd.f32 0.0, %v1116
      %v1118 = vpop.f32.mrb[0].mxu0
      %v1119 = vpop.f32.mrb[0].mxu0
      %v1120 = vadd.f32 0.0, %v1119
      %v1121 = vpop.f32.mrb[0].mxu0
      %1122 = vmatprep.mubr.bf16.mxu0 %v1029
      %1123 = vmatmul.mubr.bf16.gmra.mrb[0].mxu0 %v904
      %v1124 = vpop.f32.mrb[0].mxu0
      %v1125 = vadd.f32 0.0, %v1124
      %v1126 = vpop.f32.mrb[0].mxu0
      %v1127 = vpop.f32.mrb[0].mxu0
      %v1128 = vadd.f32 0.0, %v1127
      %v1129 = vpop.f32.mrb[0].mxu0
      %1130 = vdwg.mxu0
      %v1156 = vunpack.c.l.b16 %v865
      %v1157 = vunpack.c.l.b16 %v866
      %v1158 = vunpack.c.l.b16 %v867
      %v1159 = vunpack.c.l.b16 %v868
      %v1160 = vunpack.c.l.b16 %v869
      %v1161 = vunpack.c.l.b16 %v870
      %v1162 = vunpack.c.l.b16 %v871
      %v1163 = vunpack.c.l.b16 %v872
      %v1164 = vunpack.c.l.b16 %v873
      %v1165 = vunpack.c.l.b16 %v874
      %v1166 = vunpack.c.l.b16 %v875
      %v1167 = vunpack.c.l.b16 %v876
      %v1168 = vunpack.c.l.b16 %v877
      %v1169 = vunpack.c.l.b16 %v878
      %v1170 = vunpack.c.l.b16 %v879
      %v1171 = vunpack.c.l.b16 %v880
      %v1172 = vunpack.c.l.b16 %v881
      %v1173 = vunpack.c.l.b16 %v882
      %v1174 = vunpack.c.l.b16 %v883
      %v1175 = vunpack.c.l.b16 %v884
      %v1176 = vunpack.c.l.b16 %v885
      %v1177 = vunpack.c.l.b16 %v886
      %v1178 = vunpack.c.l.b16 %v887
      %v1179 = vunpack.c.l.b16 %v888
      %v1180 = vunpack.c.l.b16 %v889
      %v1181 = vpack.c.b16 %v1157, %v1156
      %v1182 = vpack.c.b16 %v1159, %v1158
      %v1183 = vpack.c.b16 %v1161, %v1160
      %v1184 = vpack.c.b16 %v1163, %v1162
      %v1185 = vpack.c.b16 %v1165, %v1164
      %v1186 = vpack.c.b16 %v1167, %v1166
      %v1187 = vpack.c.b16 %v1169, %v1168
      %v1188 = vpack.c.b16 %v1171, %v1170
      %v1189 = vpack.c.b16 %v1173, %v1172
      %v1190 = vpack.c.b16 %v1175, %v1174
      %v1191 = vpack.c.b16 %v1177, %v1176
      %v1192 = vpack.c.b16 %v1179, %v1178
      %v1193 = vpack.c.b16 %v1180, %v1180
      %v1207 = vsel %vm1006, %v850, 0
      %v1210 = vsel %vm1006, %v852, 0
      %v1213 = vsel %vm1006, %v854, 0
      %v1216 = vsel %vm1006, %v856, 0
      %v1219 = vsel %vm1006, %v858, 0
      %v1222 = vsel %vm1006, %v860, 0
      %v1225 = vsel %vm1006, %v862, 0
      %v1228 = vsel %vm1006, %v864, 0
      %v1231 = vsel %vm504, %v1193, 0
      %1233 = vmatprep.subr.bf16.mxu0 0
      %1234 = vmatpush1.bf16.msra.mxu0 %v1181
      %1235 = vmatprep.subr.bf16.mxu0 0
      %1236 = vmatpush1.bf16.msra.mxu0 %v1182
      %1237 = vmatprep.subr.bf16.mxu0 0
      %1238 = vmatpush1.bf16.msra.mxu0 %v1183
      %1239 = vmatprep.subr.bf16.mxu0 0
      %1240 = vmatpush1.bf16.msra.mxu0 %v1184
      %1241 = vmatprep.subr.bf16.mxu0 0
      %1242 = vmatpush1.bf16.msra.mxu0 %v1185
      %1243 = vmatprep.subr.bf16.mxu0 0
      %1244 = vmatpush1.bf16.msra.mxu0 %v1186
      %1245 = vmatprep.subr.bf16.mxu0 0
      %1246 = vmatpush1.bf16.msra.mxu0 %v1187
      %1247 = vmatprep.subr.bf16.mxu0 0
      %1248 = vmatpush1.bf16.msra.mxu0 %v1188
      %1249 = vmatprep.subr.bf16.mxu0 0
      %1250 = vmatpush1.bf16.msra.mxu0 %v1189
      %1251 = vmatprep.subr.bf16.mxu0 0
      %1252 = vmatpush1.bf16.msra.mxu0 %v1190
      %1253 = vmatprep.subr.bf16.mxu0 0
      %1254 = vmatpush1.bf16.msra.mxu0 %v1191
      %1255 = vmatprep.subr.bf16.mxu0 0
      %1256 = vmatpush1.bf16.msra.mxu0 %v1192
      %1257 = vmatprep.subr.bf16.mxu0 0
      %1258 = vmatpush1.bf16.msra.mxu0 %v1231
      %1259 = vmatprep.subr.bf16.mxu0 0
      %1260 = vmatpush1.bf16.msra.mxu0 0
      %1261 = vmatprep.subr.bf16.mxu0 0
      %1262 = vmatpush1.bf16.msra.mxu0 0
      %1263 = vmatprep.subr.bf16.mxu0 0
      %1264 = vmatpush1.bf16.msra.mxu0 0
      %1265 = vmatprep.mubr.bf16.mxu0 %v1207
      %1266 = vmatmul.mubr.bf16.gmra.mrb[0].mxu0 %v849
      %v1267 = vpop.f32.mrb[0].mxu0
      %v1268 = vadd.f32 %v1069, %v1267
      %v1269 = vpop.f32.mrb[0].mxu0
      %v1270 = vpop.f32.mrb[0].mxu0
      %v1271 = vadd.f32 %v1072, %v1270
      %v1272 = vpop.f32.mrb[0].mxu0
      %1273 = vmatprep.mubr.bf16.mxu0 %v1210
      %1274 = vmatmul.mubr.bf16.gmra.mrb[0].mxu0 %v851
      %v1275 = vpop.f32.mrb[0].mxu0
      %v1276 = vadd.f32 %v1077, %v1275
      %v1277 = vpop.f32.mrb[0].mxu0
      %v1278 = vpop.f32.mrb[0].mxu0
      %v1279 = vadd.f32 %v1080, %v1278
      %v1280 = vpop.f32.mrb[0].mxu0
      %1281 = vmatprep.mubr.bf16.mxu0 %v1213
      %1282 = vmatmul.mubr.bf16.gmra.mrb[0].mxu0 %v853
      %v1283 = vpop.f32.mrb[0].mxu0
      %v1284 = vadd.f32 %v1085, %v1283
      %v1285 = vpop.f32.mrb[0].mxu0
      %v1286 = vpop.f32.mrb[0].mxu0
      %v1287 = vadd.f32 %v1088, %v1286
      %v1288 = vpop.f32.mrb[0].mxu0
      %1289 = vmatprep.mubr.bf16.mxu0 %v1216
      %1290 = vmatmul.mubr.bf16.gmra.mrb[0].mxu0 %v855
      %v1291 = vpop.f32.mrb[0].mxu0
      %v1292 = vadd.f32 %v1093, %v1291
      %v1293 = vpop.f32.mrb[0].mxu0
      %v1294 = vpop.f32.mrb[0].mxu0
      %v1295 = vadd.f32 %v1096, %v1294
      %v1296 = vpop.f32.mrb[0].mxu0
      %1297 = vmatprep.mubr.bf16.mxu0 %v1219
      %1298 = vmatmul.mubr.bf16.gmra.mrb[0].mxu0 %v857
      %v1299 = vpop.f32.mrb[0].mxu0
      %v1300 = vadd.f32 %v1101, %v1299
      %v1301 = vpop.f32.mrb[0].mxu0
      %v1302 = vpop.f32.mrb[0].mxu0
      %v1303 = vadd.f32 %v1104, %v1302
      %v1304 = vpop.f32.mrb[0].mxu0
      %1305 = vmatprep.mubr.bf16.mxu0 %v1222
      %1306 = vmatmul.mubr.bf16.gmra.mrb[0].mxu0 %v859
      %v1307 = vpop.f32.mrb[0].mxu0
      %v1308 = vadd.f32 %v1109, %v1307
      %v1309 = vpop.f32.mrb[0].mxu0
      %v1310 = vpop.f32.mrb[0].mxu0
      %v1311 = vadd.f32 %v1112, %v1310
      %v1312 = vpop.f32.mrb[0].mxu0
      %1313 = vmatprep.mubr.bf16.mxu0 %v1225
      %1314 = vmatmul.mubr.bf16.gmra.mrb[0].mxu0 %v861
      %v1315 = vpop.f32.mrb[0].mxu0
      %v1316 = vadd.f32 %v1117, %v1315
      %v1317 = vpop.f32.mrb[0].mxu0
      %v1318 = vpop.f32.mrb[0].mxu0
      %v1319 = vadd.f32 %v1120, %v1318
      %v1320 = vpop.f32.mrb[0].mxu0
      %1321 = vmatprep.mubr.bf16.mxu0 %v1228
      %1322 = vmatmul.mubr.bf16.gmra.mrb[0].mxu0 %v863
      %v1323 = vpop.f32.mrb[0].mxu0
      %v1324 = vadd.f32 %v1125, %v1323
      %v1325 = vpop.f32.mrb[0].mxu0
      %v1326 = vpop.f32.mrb[0].mxu0
      %v1327 = vadd.f32 %v1128, %v1326
      %v1328 = vpop.f32.mrb[0].mxu0
      %1329 = vdwg.mxu0
      %v1330 = vld [vmem:[%s8] sm:$0x1]
      %v1332 = vlaneseq
      %v1333 = vshrl.u32 %v1332, 7
      %v1334 = vsub.s32 0, %v1333
      %v1335 = vrot.slane %v1330, %v1334
      %v1337 = vadd.f32 %v1268, %v1335
      %v1338 = vadd.f32 %v1271, %v1335
      %v1339 = vadd.f32 %v1276, %v1335
      %v1340 = vadd.f32 %v1279, %v1335
      %v1341 = vadd.f32 %v1284, %v1335
      %v1342 = vadd.f32 %v1287, %v1335
      %v1343 = vadd.f32 %v1292, %v1335
      %v1344 = vadd.f32 %v1295, %v1335
      %v1345 = vadd.f32 %v1300, %v1335
      %v1346 = vadd.f32 %v1303, %v1335
      %v1347 = vadd.f32 %v1308, %v1335
      %v1348 = vadd.f32 %v1311, %v1335
      %v1349 = vadd.f32 %v1316, %v1335
      %v1350 = vadd.f32 %v1319, %v1335
      %v1351 = vadd.f32 %v1324, %v1335
      %v1352 = vadd.f32 %v1327, %v1335
      %v1353 = vmax.f32 %v1337, 0.0
      %v1354 = vmax.f32 %v1338, 0.0
      %v1355 = vmax.f32 %v1339, 0.0
      %v1356 = vmax.f32 %v1340, 0.0
      %v1357 = vmax.f32 %v1341, 0.0
      %v1358 = vmax.f32 %v1342, 0.0
      %v1359 = vmax.f32 %v1343, 0.0
      %v1360 = vmax.f32 %v1344, 0.0
      %v1361 = vmax.f32 %v1345, 0.0
      %v1362 = vmax.f32 %v1346, 0.0
      %v1363 = vmax.f32 %v1347, 0.0
      %v1364 = vmax.f32 %v1348, 0.0
      %v1365 = vmax.f32 %v1349, 0.0
      %v1366 = vmax.f32 %v1350, 0.0
      %v1367 = vmax.f32 %v1351, 0.0
      %v1368 = vmax.f32 %v1352, 0.0
      %v1369 = vpack.c.bf16 %v1354, %v1353
      %v1370 = vpack.c.bf16 %v1356, %v1355
      %v1371 = vpack.c.bf16 %v1358, %v1357
      %v1372 = vpack.c.bf16 %v1360, %v1359
      %v1373 = vpack.c.bf16 %v1362, %v1361
      %v1374 = vpack.c.bf16 %v1364, %v1363
      %v1375 = vpack.c.bf16 %v1366, %v1365
      %v1376 = vpack.c.bf16 %v1368, %v1367
      %v1377 = vld [vmem:[%s9] sm:$0xf]
      %v1378 = vld [vmem:[%s9 + $0x4] sm:$0xf]
      %v1379 = vld [vmem:[%s9 + $0x8] sm:$0xf]
      %v1380 = vld [vmem:[%s9 + $0xc] sm:$0xf]
      %v1381 = vld [vmem:[%s9 + $0x10] sm:$0xf]
      %v1382 = vld [vmem:[%s9 + $0x14] sm:$0xf]
      %v1383 = vld [vmem:[%s9 + $0x18] sm:$0xf]
      %v1384 = vld [vmem:[%s9 + $0x1c] sm:$0xf]
      %v1385 = vld [vmem:[%s9 + $0x20] sm:$0xf]
      %v1386 = vld [vmem:[%s9 + $0x24] sm:$0xf]
      %v1387 = vld [vmem:[%s9 + $0x28] sm:$0xf]
      %v1388 = vld [vmem:[%s9 + $0x2c] sm:$0xf]
      %v1389 = vld [vmem:[%s9 + $0x30] sm:$0x3]
      %v1390 = vld [vmem:[%s10] sm:$0x1]
      %v1392 = vlaneseq
      %v1393 = vshrl.u32 %v1392, 7
      %v1394 = vsub.s32 0, %v1393
      %v1395 = vrot.slane %v1390, %v1394
      %v1410 = vunpack.c.l.b16 %v1377
      %v1411 = vunpack.c.l.b16 %v1378
      %v1412 = vunpack.c.l.b16 %v1379
      %v1413 = vunpack.c.l.b16 %v1380
      %v1414 = vunpack.c.l.b16 %v1381
      %v1415 = vunpack.c.l.b16 %v1382
      %v1416 = vunpack.c.l.b16 %v1383
      %v1417 = vunpack.c.l.b16 %v1384
      %v1418 = vunpack.c.l.b16 %v1385
      %v1419 = vunpack.c.l.b16 %v1386
      %v1420 = vunpack.c.l.b16 %v1387
      %v1421 = vunpack.c.l.b16 %v1388
      %v1422 = vunpack.c.l.b16 %v1389
      %v1423 = vpack.c.b16 %v1411, %v1410
      %v1424 = vpack.c.b16 %v1413, %v1412
      %v1425 = vpack.c.b16 %v1415, %v1414
      %v1426 = vpack.c.b16 %v1417, %v1416
      %v1427 = vpack.c.b16 %v1419, %v1418
      %v1428 = vpack.c.b16 %v1421, %v1420
      %v1429 = vpack.c.b16 %v1422, %v1422
      %vm1436 = vcmask 818176
      %v1438 = vsel %vm1436, %v1369, 0
      %v1441 = vsel %vm1436, %v1370, 0
      %v1444 = vsel %vm1436, %v1371, 0
      %v1447 = vsel %vm1436, %v1372, 0
      %v1450 = vsel %vm1436, %v1373, 0
      %v1453 = vsel %vm1436, %v1374, 0
      %v1456 = vsel %vm1436, %v1375, 0
      %v1459 = vsel %vm1436, %v1376, 0
      %vm1461 = vcmask 1041408
      %v1463 = vsel %vm1461, %v1429, 0
      %1465 = vmatprep.subr.bf16.mxu0 0
      %1466 = vmatpush1.bf16.msra.mxu0 %v1423
      %1467 = vmatprep.subr.bf16.mxu0 0
      %1468 = vmatpush1.bf16.msra.mxu0 %v1424
      %1469 = vmatprep.subr.bf16.mxu0 0
      %1470 = vmatpush1.bf16.msra.mxu0 %v1425
      %1471 = vmatprep.subr.bf16.mxu0 0
      %1472 = vmatpush1.bf16.msra.mxu0 %v1426
      %1473 = vmatprep.subr.bf16.mxu0 0
      %1474 = vmatpush1.bf16.msra.mxu0 %v1427
      %1475 = vmatprep.subr.bf16.mxu0 0
      %1476 = vmatpush1.bf16.msra.mxu0 %v1428
      %1477 = vmatprep.subr.bf16.mxu0 0
      %1478 = vmatpush1.bf16.msra.mxu0 %v1463
      %1479 = vmatprep.subr.bf16.mxu0 0
      %1480 = vmatpush1.bf16.msra.mxu0 0
      %1481 = vmatprep.subr.bf16.mxu0 0
      %1482 = vmatpush1.bf16.msra.mxu0 0
      %1483 = vmatprep.subr.bf16.mxu0 0
      %1484 = vmatpush1.bf16.msra.mxu0 0
      %1485 = vmatprep.subr.bf16.mxu0 0
      %1486 = vmatpush1.bf16.msra.mxu0 0
      %1487 = vmatprep.subr.bf16.mxu0 0
      %1488 = vmatpush1.bf16.msra.mxu0 0
      %1489 = vmatprep.subr.bf16.mxu0 0
      %1490 = vmatpush1.bf16.msra.mxu0 0
      %1491 = vmatprep.subr.bf16.mxu0 0
      %1492 = vmatpush1.bf16.msra.mxu0 0
      %1493 = vmatprep.subr.bf16.mxu0 0
      %1494 = vmatpush1.bf16.msra.mxu0 0
      %1495 = vmatprep.subr.bf16.mxu0 0
      %1496 = vmatpush1.bf16.msra.mxu0 0
      %1497 = vmatprep.mubr.bf16.mxu0 0
      %1498 = vmatmul.mubr.bf16.gmra.mrb[0].mxu0 %v1438
      %v1499 = vpop.f32.mrb[0].mxu0
      %v1500 = vadd.f32 %v1395, %v1499
      %v1501 = vpop.f32.mrb[0].mxu0
      %v1502 = vpop.f32.mrb[0].mxu0
      %v1503 = vadd.f32 %v1395, %v1502
      %v1504 = vpop.f32.mrb[0].mxu0
      %1505 = vmatprep.mubr.bf16.mxu0 0
      %1506 = vmatmul.mubr.bf16.gmra.mrb[0].mxu0 %v1441
      %v1507 = vpop.f32.mrb[0].mxu0
      %v1508 = vadd.f32 %v1395, %v1507
      %v1509 = vpop.f32.mrb[0].mxu0
      %v1510 = vpop.f32.mrb[0].mxu0
      %v1511 = vadd.f32 %v1395, %v1510
      %v1512 = vpop.f32.mrb[0].mxu0
      %1513 = vmatprep.mubr.bf16.mxu0 0
      %1514 = vmatmul.mubr.bf16.gmra.mrb[0].mxu0 %v1444
      %v1515 = vpop.f32.mrb[0].mxu0
      %v1516 = vadd.f32 %v1395, %v1515
      %v1517 = vpop.f32.mrb[0].mxu0
      %v1518 = vpop.f32.mrb[0].mxu0
      %v1519 = vadd.f32 %v1395, %v1518
      %v1520 = vpop.f32.mrb[0].mxu0
      %1521 = vmatprep.mubr.bf16.mxu0 0
      %1522 = vmatmul.mubr.bf16.gmra.mrb[0].mxu0 %v1447
      %v1523 = vpop.f32.mrb[0].mxu0
      %v1524 = vadd.f32 %v1395, %v1523
      %v1525 = vpop.f32.mrb[0].mxu0
      %v1526 = vpop.f32.mrb[0].mxu0
      %v1527 = vadd.f32 %v1395, %v1526
      %v1528 = vpop.f32.mrb[0].mxu0
      %1529 = vmatprep.mubr.bf16.mxu0 0
      %1530 = vmatmul.mubr.bf16.gmra.mrb[0].mxu0 %v1450
      %v1531 = vpop.f32.mrb[0].mxu0
      %v1532 = vadd.f32 %v1395, %v1531
      %v1533 = vpop.f32.mrb[0].mxu0
      %v1534 = vpop.f32.mrb[0].mxu0
      %v1535 = vadd.f32 %v1395, %v1534
      %v1536 = vpop.f32.mrb[0].mxu0
      %1537 = vmatprep.mubr.bf16.mxu0 0
      %1538 = vmatmul.mubr.bf16.gmra.mrb[0].mxu0 %v1453
      %v1539 = vpop.f32.mrb[0].mxu0
      %v1540 = vadd.f32 %v1395, %v1539
      %v1541 = vpop.f32.mrb[0].mxu0
      %v1542 = vpop.f32.mrb[0].mxu0
      %v1543 = vadd.f32 %v1395, %v1542
      %v1544 = vpop.f32.mrb[0].mxu0
      %1545 = vmatprep.mubr.bf16.mxu0 0
      %1546 = vmatmul.mubr.bf16.gmra.mrb[0].mxu0 %v1456
      %v1547 = vpop.f32.mrb[0].mxu0
      %v1548 = vadd.f32 %v1395, %v1547
      %v1549 = vpop.f32.mrb[0].mxu0
      %v1550 = vpop.f32.mrb[0].mxu0
      %v1551 = vadd.f32 %v1395, %v1550
      %v1552 = vpop.f32.mrb[0].mxu0
      %1553 = vmatprep.mubr.bf16.mxu0 0
      %1554 = vmatmul.mubr.bf16.gmra.mrb[0].mxu0 %v1459
      %v1555 = vpop.f32.mrb[0].mxu0
      %v1556 = vadd.f32 %v1395, %v1555
      %v1557 = vpop.f32.mrb[0].mxu0
      %v1558 = vpop.f32.mrb[0].mxu0
      %v1559 = vadd.f32 %v1395, %v1558
      %v1560 = vpop.f32.mrb[0].mxu0
      %1561 = vdwg.mxu0
      %v1562 = vmax.f32 %v1500, 0.0
      %v1563 = vmax.f32 %v1503, 0.0
      %v1564 = vmax.f32 %v1508, 0.0
      %v1565 = vmax.f32 %v1511, 0.0
      %v1566 = vmax.f32 %v1516, 0.0
      %v1567 = vmax.f32 %v1519, 0.0
      %v1568 = vmax.f32 %v1524, 0.0
      %v1569 = vmax.f32 %v1527, 0.0
      %v1570 = vmax.f32 %v1532, 0.0
      %v1571 = vmax.f32 %v1535, 0.0
      %v1572 = vmax.f32 %v1540, 0.0
      %v1573 = vmax.f32 %v1543, 0.0
      %v1574 = vmax.f32 %v1548, 0.0
      %v1575 = vmax.f32 %v1551, 0.0
      %v1576 = vmax.f32 %v1556, 0.0
      %v1577 = vmax.f32 %v1559, 0.0
      %v1578 = vmin.f32 %v1562, 2.0
      %v1579 = vmin.f32 %v1563, 2.0
      %v1580 = vmin.f32 %v1564, 2.0
      %v1581 = vmin.f32 %v1565, 2.0
      %v1582 = vmin.f32 %v1566, 2.0
      %v1583 = vmin.f32 %v1567, 2.0
      %v1584 = vmin.f32 %v1568, 2.0
      %v1585 = vmin.f32 %v1569, 2.0
      %v1586 = vmin.f32 %v1570, 2.0
      %v1587 = vmin.f32 %v1571, 2.0
      %v1588 = vmin.f32 %v1572, 2.0
      %v1589 = vmin.f32 %v1573, 2.0
      %v1590 = vmin.f32 %v1574, 2.0
      %v1591 = vmin.f32 %v1575, 2.0
      %v1592 = vmin.f32 %v1576, 2.0
      %v1593 = vmin.f32 %v1577, 2.0
      %v1594 = vlaneseq
      %v1595 = vand.u32 %v1594, 127
      %vm1596 = vcmp.ge.s32.totalorder %v1595, 2
      %v1597 = vsel %vm1596, %v1578, %v1500
      %v1598 = vsel %vm1596, %v1579, %v1503
      %v1599 = vsel %vm1596, %v1580, %v1508
      %v1600 = vsel %vm1596, %v1581, %v1511
      %v1601 = vsel %vm1596, %v1582, %v1516
      %v1602 = vsel %vm1596, %v1583, %v1519
      %v1603 = vsel %vm1596, %v1584, %v1524
      %v1604 = vsel %vm1596, %v1585, %v1527
      %v1605 = vsel %vm1596, %v1586, %v1532
      %v1606 = vsel %vm1596, %v1587, %v1535
      %v1607 = vsel %vm1596, %v1588, %v1540
      %v1608 = vsel %vm1596, %v1589, %v1543
      %v1609 = vsel %vm1596, %v1590, %v1548
      %v1610 = vsel %vm1596, %v1591, %v1551
      %v1611 = vsel %vm1596, %v1592, %v1556
      %v1612 = vsel %vm1596, %v1593, %v1559
      %vm1613 = vcmask 31744
      %1614 = vst.msk [vmem:[%s410] sm:$0xff] %vm1613, %v1597
      %1615 = vst.msk [vmem:[%s410 + $0x8] sm:$0xff] %vm1613, %v1598
      %1616 = vst.msk [vmem:[%s410 + $0x10] sm:$0xff] %vm1613, %v1599
      %1617 = vst.msk [vmem:[%s410 + $0x18] sm:$0xff] %vm1613, %v1600
      %1618 = vst.msk [vmem:[%s410 + $0x20] sm:$0xff] %vm1613, %v1601
      %1619 = vst.msk [vmem:[%s410 + $0x28] sm:$0xff] %vm1613, %v1602
      %1620 = vst.msk [vmem:[%s410 + $0x30] sm:$0xff] %vm1613, %v1603
      %1621 = vst.msk [vmem:[%s410 + $0x38] sm:$0xff] %vm1613, %v1604
      %1622 = vst.msk [vmem:[%s410 + $0x40] sm:$0xff] %vm1613, %v1605
      %1623 = vst.msk [vmem:[%s410 + $0x48] sm:$0xff] %vm1613, %v1606
      %1624 = vst.msk [vmem:[%s410 + $0x50] sm:$0xff] %vm1613, %v1607
      %1625 = vst.msk [vmem:[%s410 + $0x58] sm:$0xff] %vm1613, %v1608
      %1626 = vst.msk [vmem:[%s410 + $0x60] sm:$0xff] %vm1613, %v1609
      %1627 = vst.msk [vmem:[%s410 + $0x68] sm:$0xff] %vm1613, %v1610
      %1628 = vst.msk [vmem:[%s410 + $0x70] sm:$0xff] %vm1613, %v1611
      %1629 = vst.msk [vmem:[%s410 + $0x78] sm:$0xff] %vm1613, %v1612
      %s1630 = smul.u32 16, %s22
      %p1631 = scmp.lt.s32.totalorder %s1630, 31
      %s1632 = scalar_select %p1631, %s1630, 31
      %s1633 = smul.addr %s1632, 8
      %s1634 = scalar_lea.vmem %s11, %s1633
      // Predicated region
      $region65: #{tpu_custom_call.1} parent=63 // pred_check
        %p1635 = pneg %p281
      $region66: #{tpu_custom_call.1} parent=63 // pred_check_branch
        %1637 = sbr.rel (%p1635) target = $region68
      $region67: #{tpu_custom_call.1} parent=63 // pred_region
        %s1638 = smul.u32 16, %s22
      $region68: #{tpu_custom_call.1} parent=63 // pred_fallthru
        _
    $region64: #{tpu_custom_call.1} parent=5 // pred_fallthru
      _
    %p1639 = scmp.le.s32.totalorder 2, %s17
    // Predicated region
    $region69: #{tpu_custom_call.1} parent=5 // pred_check
      %p1640 = pneg %p1639
    $region70: #{tpu_custom_call.1} parent=5 // pred_check_branch
      %1642 = sbr.rel (%p1640) target = $region72
    $region71: #{tpu_custom_call.1} parent=5 // pred_region
      %s1643 = ssub.s32 %s17, 2
      // Predicated region
      $region73: #{tpu_custom_call.1} parent=71 // pred_check
        %p1644 = pneg %p287
      $region74: #{tpu_custom_call.1} parent=71 // pred_check_branch
        %1646 = sbr.rel (%p1644) target = $region76
      $region75: #{tpu_custom_call.1} parent=71 // pred_region
        %s1647 = smul.u32 16, %s23
        %p1648 = scmp.lt.s32.totalorder %s1647, 31
        %s1649 = scalar_select %p1648, %s1647, 31
        %s1650 = smul.addr %s1649, 8
        %s1651 = scalar_lea.vmem %s11, %s1650
      $region76: #{tpu_custom_call.1} parent=71 // pred_fallthru
        _
    $region72: #{tpu_custom_call.1} parent=5 // pred_fallthru
      _
  $region6: #{tpu_custom_call.1} parent=0 // loop_footer
    %s21 = sadd.s32 1, %s17
  $region7: #{tpu_custom_call.1} parent=0 // loop_footer_branch
    %16 = sbr.rel target = $region3
  $region8: #{tpu_custom_call.1} parent=0 // loop_exit
    _

</llo_original>
